<compile_context>
chip_gen: v7x
topology: tpu7x:2x2x1
jax: 0.10.0
libtpu: 0.0.40
codegen_flags: <defaults>
</compile_context>

<pallas_src>
import functools

import jax
import jax.numpy as jnp
from jax.experimental import pallas as pl
from jax.experimental.pallas import tpu as pltpu


def _round_up(x, m):
    return (x + m - 1) // m * m


def _textcnn_kernel(fs_max, emb_ref, w_ref, b_ref, mask_ref, fcw_ref, fcb_ref,
                    out_ref):
    """One grid step = TB batch rows.

    emb_ref : (TB, S_pad, E)        bf16
    w_ref   : (fs_max*E, nf_pad)    bf16  (tap k -> rows [k*E:(k+1)*E]; all
                                           branches packed on the 128 lanes,
                                           zero where tap >= branch fs)
    b_ref   : (1, nf_pad)           f32
    mask_ref: (L_blk, nf_pad)       f32   (1.0 where position < branch's L)
    fcw_ref : (nf_pad, out_pad)     bf16
    fcb_ref : (1, out_pad)          f32
    out_ref : (TB, out_pad)         f32
    """
    emb = emb_ref[...]                          # (TB, S_pad, E) bf16
    TB, _, E = emb.shape
    L_blk, nf_pad = mask_ref.shape
    w_all = w_ref[...]                          # (fs_max*E, nf_pad) bf16

    # Conv for every branch at once: taps accumulated via shifted bf16 LHS
    # slices; each tap is one MXU matmul (M=TB*L_blk, K=E, N=nf_pad) with f32
    # accumulation.  L_blk % 16 == 0 so the 3D->2D reshape is a free view.
    acc = None
    for k in range(fs_max):                     # static, unrolled
        lhs = emb[:, k:k + L_blk, :].reshape(TB * L_blk, E)
        part = jnp.dot(lhs, w_all[k * E:(k + 1) * E, :],
                       preferred_element_type=jnp.float32)
        acc = part if acc is None else acc + part

    y = acc.reshape(TB, L_blk, nf_pad)
    y = jnp.maximum(y + b_ref[...].reshape(1, 1, nf_pad), 0.0)     # bias + ReLU
    # Zero positions past each branch's valid conv length (post-ReLU values are
    # >= 0, so masking to 0 leaves the max-over-time exact).
    y = y * mask_ref[...].reshape(1, L_blk, nf_pad)
    pooled = jnp.max(y, axis=1)                 # (TB, nf_pad) f32

    out_ref[...] = (jnp.dot(pooled.astype(jnp.bfloat16), fcw_ref[...],
                            preferred_element_type=jnp.float32)
                    + fcb_ref[...])


def _prepare_weights(params, filter_sizes, nf_pad, out_pad, l_blk, seq_len):
    """Pack all branches into one shared 128-lane group (host-side, once)."""
    nf = params["conv_w"][0].shape[-1]
    emb_dim = params["conv_w"][0].shape[1]
    n = len(filter_sizes)
    fs_max = max(filter_sizes)
    out_dim = params["fc_b"].shape[-1]

    w_taps = jnp.zeros((fs_max * emb_dim, nf_pad), jnp.float32)
    bias = jnp.zeros((1, nf_pad), jnp.float32)
    mask = jnp.zeros((l_blk, nf_pad), jnp.float32)
    for i, fs in enumerate(filter_sizes):
        w = params["conv_w"][i]                               # (fs, E, nf)
        w_taps = w_taps.at[: fs * emb_dim, i * nf:(i + 1) * nf].set(
            w.reshape(fs * emb_dim, nf))
        bias = bias.at[:, i * nf:(i + 1) * nf].set(params["conv_b"][i])
        L_i = seq_len - fs + 1
        mask = mask.at[:L_i, i * nf:(i + 1) * nf].set(1.0)

    fcw = (jnp.zeros((nf_pad, out_pad), jnp.float32)
           .at[: n * nf, :out_dim].set(params["fc_w"]))
    fcb = (jnp.zeros((1, out_pad), jnp.float32)
           .at[:, :out_dim].set(params["fc_b"]))
    return (w_taps.astype(jnp.bfloat16), bias, mask,
            fcw.astype(jnp.bfloat16), fcb)


def classifier_forward(sequences, params, filter_sizes):
    """sequences: (B, S) int32 token ids. Returns (B, output_dim) float32."""
    filter_sizes = list(filter_sizes)
    out_dim = params["fc_b"].shape[-1]
    nf = params["conv_w"][0].shape[-1]
    emb_dim = params["embedding"].shape[-1]
    n = len(filter_sizes)
    fs_max, fs_min = max(filter_sizes), min(filter_sizes)
    B, S = sequences.shape
    assert S >= fs_max, "sequence length must be >= the largest filter size"
    # Note: jnp.take clamps out-of-range token ids (PyTorch would raise).

    nf_pad = _round_up(n * nf, 128)      # all branches share one lane group
    out_pad = _round_up(out_dim, 128)    # lane-dense output store
    L_max = S - fs_min + 1
    L_blk = _round_up(L_max, 16)         # bf16 sublane tile -> free reshapes
    S_pad = _round_up(max(S, L_blk + fs_max - 1), 16)

    # --- batch tile from a VMEM byte budget (not hardcoded) ---
    def step_bytes(tb):
        return (2 * tb * S_pad * emb_dim * 2          # double-buffered emb in
                + 2 * tb * out_pad * 4                # double-buffered out
                + tb * L_blk * nf_pad * 4             # f32 conv accumulator
                + 2 * tb * L_blk * emb_dim * 2        # shifted bf16 tap copies
                + 2 * (fs_max * emb_dim * nf_pad * 2 + nf_pad * 4
                       + L_blk * nf_pad * 4 + nf_pad * out_pad * 2
                       + out_pad * 4))                # resident weights/mask

    VMEM_BUDGET = 10 * 1024 * 1024       # comfortably under v5e's 16 MiB scoped
    TB = min(128, _round_up(B, 8))
    while TB > 8 and step_bytes(TB) > VMEM_BUDGET:
        TB -= 8
    # Ensure >= 2 grid steps when the batch allows it so dimension_semantics
    # ("parallel",) can split work across v7x's 2 TensorCores.
    if B >= 16 and _round_up(B, TB) == TB:
        TB = _round_up(B, 16) // 2
    B_pad = _round_up(B, TB)

    # Embedding gather in bf16 (table cast once), padded in bf16 -> half the
    # HBM bytes of the old f32 gather-then-cast-then-pad path.
    emb_table = params["embedding"].astype(jnp.bfloat16)
    embedded = jnp.take(emb_table, sequences, axis=0)            # (B,S,E) bf16
    embedded = jnp.pad(embedded, ((0, B_pad - B), (0, S_pad - S), (0, 0)))

    w_taps, bias, mask, fcw, fcb = _prepare_weights(
        params, filter_sizes, nf_pad, out_pad, L_blk, S)

    args = [embedded, w_taps, bias, mask, fcw, fcb]
    # Weight/bias/mask index maps are constant (block (0,0) every step) so the
    # blocks stay VMEM-resident across the batch grid instead of re-DMA'ing.
    in_specs = [pl.BlockSpec((TB, S_pad, emb_dim), lambda b: (b, 0, 0))]
    for a in args[1:]:
        in_specs.append(pl.BlockSpec(a.shape, lambda b: (0, 0)))

    flops = (2 * B_pad * L_blk * (fs_max * emb_dim) * nf_pad
             + 2 * B_pad * nf_pad * out_pad)
    bytes_accessed = int(
        embedded.size * embedded.dtype.itemsize + B_pad * out_pad * 4
        + sum(int(a.size) * a.dtype.itemsize for a in args[1:]))

    kernel = functools.partial(_textcnn_kernel, fs_max)
    out = pl.pallas_call(
        kernel,
        grid=(B_pad // TB,),
        in_specs=in_specs,
        out_specs=pl.BlockSpec((TB, out_pad), lambda b: (b, 0)),
        out_shape=jax.ShapeDtypeStruct((B_pad, out_pad), jnp.float32),
        compiler_params=pltpu.CompilerParams(
            dimension_semantics=("parallel",),
            vmem_limit_bytes=32 * 1024 * 1024),
        cost_estimate=pl.CostEstimate(flops=int(flops), transcendentals=0,
                                      bytes_accessed=bytes_accessed),
    )(*args)
    return out[:B, :out_dim]


def reference_forward(sequences, params, filter_sizes):
    """Pure-JAX f32 reference mirroring the PyTorch forward (eval mode)."""
    embedded = jnp.take(params["embedding"], sequences, axis=0)  # (B, S, E)
    B, S, E = embedded.shape
    pooled = []
    for i, fs in enumerate(filter_sizes):
        W = params["conv_w"][i]          # (fs, E, nf)
        b = params["conv_b"][i]          # (1, nf)
        L = S - fs + 1
        outs = []
        for t in range(L):
            window = embedded[:, t:t + fs, :]                   # (B, fs, E)
            outs.append(jnp.einsum("bke,kef->bf", window, W) + b)
        conv = jnp.maximum(jnp.stack(outs, axis=1), 0.0)        # (B, L, nf)
        pooled.append(jnp.max(conv, axis=1))                    # (B, nf)
    cat = jnp.concatenate(pooled, axis=1)
    return cat @ params["fc_w"] + params["fc_b"]


def init_params(key, vocab, emb_dim, num_filters, filter_sizes, out_dim,
                padding_idx):
    keys = jax.random.split(key, 3 + 2 * len(filter_sizes))
    embedding = 0.1 * jax.random.normal(keys[0], (vocab, emb_dim), jnp.float32)
    embedding = embedding.at[padding_idx].set(0.0)               # padding row = 0
    conv_w, conv_b = [], []
    for i, fs in enumerate(filter_sizes):
        conv_w.append(0.1 * jax.random.normal(
            keys[1 + 2 * i], (fs, emb_dim, num_filters), jnp.float32))
        conv_b.append(0.05 * jax.random.normal(
            keys[2 + 2 * i], (1, num_filters), jnp.float32))
    fc_w = 0.1 * jax.random.normal(
        keys[-2], (len(filter_sizes) * num_filters, out_dim), jnp.float32)
    fc_b = 0.05 * jax.random.normal(keys[-1], (1, out_dim), jnp.float32)
    return {"embedding": embedding, "conv_w": conv_w, "conv_b": conv_b,
            "fc_w": fc_w, "fc_b": fc_b}


if __name__ == "__main__":
    # small, module-consistent shapes
    VOCAB, EMB, NF, OUT = 20, 32, 8, 4
    FILTER_SIZES = [3, 4, 5]
    PAD_IDX = 0
    B, S = 2, 16

    key = jax.random.PRNGKey(0)
    pkey, skey = jax.random.split(key)
    params = init_params(pkey, VOCAB, EMB, NF, FILTER_SIZES, OUT, PAD_IDX)
    sequences = jax.random.randint(skey, (B, S), 0, VOCAB, dtype=jnp.int32)

    out = classifier_forward(sequences, params, FILTER_SIZES)
    out = jax.block_until_ready(out)

    ref = reference_forward(sequences, params, FILTER_SIZES)
    assert out.shape == (B, OUT)
    # kernel runs matmuls on bf16 inputs (f32 accumulation); compare against
    # the f32 reference with a bf16-appropriate tolerance.
    assert jnp.allclose(out, ref, atol=2e-2, rtol=2e-2)

    print("KERNEL_OK")
</pallas_src>

<mosaic_0001>
module attributes {stable_mosaic.version = 11 : i64} {
  func.func @_textcnn_kernel(%arg0: i32, %arg1: memref<8x32x32xbf16, #tpu.memory_space<vmem>>, %arg2: memref<160x128xbf16, #tpu.memory_space<vmem>>, %arg3: memref<1x128xf32, #tpu.memory_space<vmem>>, %arg4: memref<16x128xf32, #tpu.memory_space<vmem>>, %arg5: memref<128x128xbf16, #tpu.memory_space<vmem>>, %arg6: memref<1x128xf32, #tpu.memory_space<vmem>>, %arg7: memref<8x128xf32, #tpu.memory_space<vmem>>) attributes {dimension_semantics = [#tpu.dimension_semantics<parallel>], iteration_bounds = array<i64: 1>, scalar_prefetch = 0 : i64, scratch_operands = 0 : i64, tpu.core_type = #tpu.core_type<tc>, window_params = [{transform_indices = @transform_0, window_bounds = array<i64: 8, 32, 32>}, {pipeline_mode = #tpu.pipeline_mode<synchronous>, transform_indices = @transform_1, window_bounds = array<i64: 160, 128>}, {pipeline_mode = #tpu.pipeline_mode<synchronous>, transform_indices = @transform_2, window_bounds = array<i64: 1, 128>}, {pipeline_mode = #tpu.pipeline_mode<synchronous>, transform_indices = @transform_3, window_bounds = array<i64: 16, 128>}, {pipeline_mode = #tpu.pipeline_mode<synchronous>, transform_indices = @transform_4, window_bounds = array<i64: 128, 128>}, {pipeline_mode = #tpu.pipeline_mode<synchronous>, transform_indices = @transform_5, window_bounds = array<i64: 1, 128>}, {transform_indices = @transform_6, window_bounds = array<i64: 8, 128>}]} {
    %c0 = arith.constant 0 : index
    %c0_0 = arith.constant 0 : index
    %c0_1 = arith.constant 0 : index
    %0 = vector.load %arg1[%c0, %c0_0, %c0_1] : memref<8x32x32xbf16, #tpu.memory_space<vmem>>, vector<8x32x32xbf16>
    %c0_2 = arith.constant 0 : index
    %c0_3 = arith.constant 0 : index
    %1 = vector.load %arg2[%c0_2, %c0_3] : memref<160x128xbf16, #tpu.memory_space<vmem>>, vector<160x128xbf16>
    %2 = vector.extract_strided_slice %0 {offsets = [0, 0, 0], sizes = [8, 16, 32], strides = [1, 1, 1]} : vector<8x32x32xbf16> to vector<8x16x32xbf16>
    %3 = vector.shape_cast %2 : vector<8x16x32xbf16> to vector<128x32xbf16>
    %4 = vector.extract_strided_slice %1 {offsets = [0, 0], sizes = [32, 128], strides = [1, 1]} : vector<160x128xbf16> to vector<32x128xbf16>
    %cst = arith.constant dense<0.000000e+00> : vector<128x128xf32>
    %5 = tpu.matmul %3, %4, %cst {dimension_numbers = #tpu.dot_dimension_numbers<[1], [0], [0], [1], [0, 0, 1, 1], [], []>} : vector<128x32xbf16>, vector<32x128xbf16>, vector<128x128xf32> -> vector<128x128xf32>
    %6 = vector.extract_strided_slice %0 {offsets = [0, 1, 0], sizes = [8, 16, 32], strides = [1, 1, 1]} : vector<8x32x32xbf16> to vector<8x16x32xbf16>
    %7 = vector.shape_cast %6 : vector<8x16x32xbf16> to vector<128x32xbf16>
    %8 = vector.extract_strided_slice %1 {offsets = [32, 0], sizes = [32, 128], strides = [1, 1]} : vector<160x128xbf16> to vector<32x128xbf16>
    %cst_4 = arith.constant dense<0.000000e+00> : vector<128x128xf32>
    %9 = tpu.matmul %7, %8, %cst_4 {dimension_numbers = #tpu.dot_dimension_numbers<[1], [0], [0], [1], [0, 0, 1, 1], [], []>} : vector<128x32xbf16>, vector<32x128xbf16>, vector<128x128xf32> -> vector<128x128xf32>
    %10 = arith.addf %5, %9 : vector<128x128xf32>
    %11 = vector.extract_strided_slice %0 {offsets = [0, 2, 0], sizes = [8, 16, 32], strides = [1, 1, 1]} : vector<8x32x32xbf16> to vector<8x16x32xbf16>
    %12 = vector.shape_cast %11 : vector<8x16x32xbf16> to vector<128x32xbf16>
    %13 = vector.extract_strided_slice %1 {offsets = [64, 0], sizes = [32, 128], strides = [1, 1]} : vector<160x128xbf16> to vector<32x128xbf16>
    %cst_5 = arith.constant dense<0.000000e+00> : vector<128x128xf32>
    %14 = tpu.matmul %12, %13, %cst_5 {dimension_numbers = #tpu.dot_dimension_numbers<[1], [0], [0], [1], [0, 0, 1, 1], [], []>} : vector<128x32xbf16>, vector<32x128xbf16>, vector<128x128xf32> -> vector<128x128xf32>
    %15 = arith.addf %10, %14 : vector<128x128xf32>
    %16 = vector.extract_strided_slice %0 {offsets = [0, 3, 0], sizes = [8, 16, 32], strides = [1, 1, 1]} : vector<8x32x32xbf16> to vector<8x16x32xbf16>
    %17 = vector.shape_cast %16 : vector<8x16x32xbf16> to vector<128x32xbf16>
    %18 = vector.extract_strided_slice %1 {offsets = [96, 0], sizes = [32, 128], strides = [1, 1]} : vector<160x128xbf16> to vector<32x128xbf16>
    %cst_6 = arith.constant dense<0.000000e+00> : vector<128x128xf32>
    %19 = tpu.matmul %17, %18, %cst_6 {dimension_numbers = #tpu.dot_dimension_numbers<[1], [0], [0], [1], [0, 0, 1, 1], [], []>} : vector<128x32xbf16>, vector<32x128xbf16>, vector<128x128xf32> -> vector<128x128xf32>
    %20 = arith.addf %15, %19 : vector<128x128xf32>
    %21 = vector.extract_strided_slice %0 {offsets = [0, 4, 0], sizes = [8, 16, 32], strides = [1, 1, 1]} : vector<8x32x32xbf16> to vector<8x16x32xbf16>
    %22 = vector.shape_cast %21 : vector<8x16x32xbf16> to vector<128x32xbf16>
    %23 = vector.extract_strided_slice %1 {offsets = [128, 0], sizes = [32, 128], strides = [1, 1]} : vector<160x128xbf16> to vector<32x128xbf16>
    %cst_7 = arith.constant dense<0.000000e+00> : vector<128x128xf32>
    %24 = tpu.matmul %22, %23, %cst_7 {dimension_numbers = #tpu.dot_dimension_numbers<[1], [0], [0], [1], [0, 0, 1, 1], [], []>} : vector<128x32xbf16>, vector<32x128xbf16>, vector<128x128xf32> -> vector<128x128xf32>
    %25 = arith.addf %20, %24 : vector<128x128xf32>
    %26 = vector.shape_cast %25 : vector<128x128xf32> to vector<8x16x128xf32>
    %c0_8 = arith.constant 0 : index
    %c0_9 = arith.constant 0 : index
    %27 = vector.load %arg3[%c0_8, %c0_9] : memref<1x128xf32, #tpu.memory_space<vmem>>, vector<1x128xf32>
    %28 = vector.shape_cast %27 : vector<1x128xf32> to vector<1x1x128xf32>
    %29 = vector.broadcast %28 : vector<1x1x128xf32> to vector<8x16x128xf32>
    %30 = arith.addf %26, %29 : vector<8x16x128xf32>
    %cst_10 = arith.constant 0.000000e+00 : f32
    %31 = vector.broadcast %cst_10 : f32 to vector<8x16x128xf32>
    %32 = arith.maximumf %30, %31 : vector<8x16x128xf32>
    %c0_11 = arith.constant 0 : index
    %c0_12 = arith.constant 0 : index
    %33 = vector.load %arg4[%c0_11, %c0_12] : memref<16x128xf32, #tpu.memory_space<vmem>>, vector<16x128xf32>
    %34 = vector.shape_cast %33 : vector<16x128xf32> to vector<1x16x128xf32>
    %35 = vector.broadcast %34 : vector<1x16x128xf32> to vector<8x16x128xf32>
    %36 = arith.mulf %32, %35 : vector<8x16x128xf32>
    %cst_13 = arith.constant dense<0xFF800000> : vector<8x128xf32>
    %37 = vector.multi_reduction <maximumf>, %36, %cst_13 [1] : vector<8x16x128xf32> to vector<8x128xf32>
    %38 = arith.truncf %37 : vector<8x128xf32> to vector<8x128xbf16>
    %c0_14 = arith.constant 0 : index
    %c0_15 = arith.constant 0 : index
    %39 = vector.load %arg5[%c0_14, %c0_15] : memref<128x128xbf16, #tpu.memory_space<vmem>>, vector<128x128xbf16>
    %cst_16 = arith.constant dense<0.000000e+00> : vector<8x128xf32>
    %40 = tpu.matmul %38, %39, %cst_16 {dimension_numbers = #tpu.dot_dimension_numbers<[1], [0], [0], [1], [0, 0, 1, 1], [], []>} : vector<8x128xbf16>, vector<128x128xbf16>, vector<8x128xf32> -> vector<8x128xf32>
    %c0_17 = arith.constant 0 : index
    %c0_18 = arith.constant 0 : index
    %41 = vector.load %arg6[%c0_17, %c0_18] : memref<1x128xf32, #tpu.memory_space<vmem>>, vector<1x128xf32>
    %42 = vector.broadcast %41 : vector<1x128xf32> to vector<8x128xf32>
    %43 = arith.addf %40, %42 : vector<8x128xf32>
    %c0_19 = arith.constant 0 : index
    %c0_20 = arith.constant 0 : index
    %44 = vector.load %arg7[%c0_19, %c0_20] : memref<8x128xf32, #tpu.memory_space<vmem>>, vector<8x128xf32>
    tpu.vector_store %arg7[%c0_19, %c0_20], %43 {strides = array<i32>} : memref<8x128xf32, #tpu.memory_space<vmem>>, vector<8x128xf32>,
    return
  }
  func.func @transform_0(%arg0: i32) -> (i32, i32, i32) {
    %c0_i32 = arith.constant 0 : i32
    %c0_i32_0 = arith.constant 0 : i32
    %c0_i32_1 = arith.constant 0 : i32
    return %arg0, %c0_i32, %c0_i32_0 : i32, i32, i32
  }
  func.func @transform_1(%arg0: i32) -> (i32, i32) {
    %c0_i32 = arith.constant 0 : i32
    %c0_i32_0 = arith.constant 0 : i32
    %c0_i32_1 = arith.constant 0 : i32
    return %c0_i32, %c0_i32_0 : i32, i32
  }
  func.func @transform_2(%arg0: i32) -> (i32, i32) {
    %c0_i32 = arith.constant 0 : i32
    %c0_i32_0 = arith.constant 0 : i32
    %c0_i32_1 = arith.constant 0 : i32
    return %c0_i32, %c0_i32_0 : i32, i32
  }
  func.func @transform_3(%arg0: i32) -> (i32, i32) {
    %c0_i32 = arith.constant 0 : i32
    %c0_i32_0 = arith.constant 0 : i32
    %c0_i32_1 = arith.constant 0 : i32
    return %c0_i32, %c0_i32_0 : i32, i32
  }
  func.func @transform_4(%arg0: i32) -> (i32, i32) {
    %c0_i32 = arith.constant 0 : i32
    %c0_i32_0 = arith.constant 0 : i32
    %c0_i32_1 = arith.constant 0 : i32
    return %c0_i32, %c0_i32_0 : i32, i32
  }
  func.func @transform_5(%arg0: i32) -> (i32, i32) {
    %c0_i32 = arith.constant 0 : i32
    %c0_i32_0 = arith.constant 0 : i32
    %c0_i32_1 = arith.constant 0 : i32
    return %c0_i32, %c0_i32_0 : i32, i32
  }
  func.func @transform_6(%arg0: i32) -> (i32, i32) {
    %c0_i32 = arith.constant 0 : i32
    %c0_i32_0 = arith.constant 0 : i32
    return %arg0, %c0_i32 : i32, i32
  }
}

</mosaic_0001>

<llo_original>
// kernel: tpu_custom_call.1
$region0: #{tpu_custom_call.1}
  #allocation0 [shape = 'u32[]', space=smem, size = 0x4, offset = 0x4, fixed_abs, tag = 'smem constant byte address 0x4 - core index']
  #allocation1 [shape = 'u32[144,128]{1,0:T(1,128)}', space=vmem, size = 0x12000, scoped, tag = 'internal scratch']
  %s0 = inlined_call_operand.hbm [shape: bf16[8,32,32], index: 0, kind: input, shape index: {}]
  %s1 = inlined_call_operand.hbm [shape: bf16[160,128], index: 1, kind: input, shape index: {}]
  %s2 = inlined_call_operand.vmem [shape: f32[1,128], index: 2, kind: input, shape index: {}]
  %s3 = inlined_call_operand.hbm [shape: f32[16,128], index: 3, kind: input, shape index: {}]
  %s4 = inlined_call_operand.hbm [shape: bf16[128,128], index: 4, kind: input, shape index: {}]
  %s5 = inlined_call_operand.vmem [shape: f32[1,128], index: 5, kind: input, shape index: {}]
  %s6 = inlined_call_operand.hbm [shape: f32[8,128], index: 6, kind: output, shape index: {}]
  %s7 = sld [smem:[#allocation0]]
  $region50: #{tpu_custom_call.1} parent=0
    _
  %s9 = ssub.s32 1, %s7
  %s10 = scalar_select 0, %s9, %s7
  $region1: #{tpu_custom_call.1} parent=0
    #allocation2 [shape = 'u8[65536]{0}', space=vmem, size = 0x10000, scoped, tag = 'input window, operand 0, single buffered']
    #allocation3 [shape = 's32[1]{0}', space=sflag, size = 0x4, scoped, tag = 'scoped memory for tpu_custom_call.1']
    #allocation4 [shape = 's32[1]{0}', space=sflag, size = 0x4, scoped, tag = 'scoped memory for tpu_custom_call.1']
    #allocation5 [shape = 'u8[40960]{0}', space=vmem, size = 0xa000, scoped, tag = 'input window, operand 1, single buffered']
    #allocation6 [shape = 's32[1]{0}', space=sflag, size = 0x4, scoped, tag = 'scoped memory for tpu_custom_call.1']
    #allocation7 [shape = 'u8[8192]{0}', space=vmem, size = 0x2000, scoped, tag = 'input window, operand 3, single buffered']
    #allocation8 [shape = 'u8[32768]{0}', space=vmem, size = 0x8000, scoped, tag = 'input window, operand 4, single buffered']
    #allocation9 [shape = 's32[1]{0}', space=sflag, size = 0x4, scoped, tag = 'scoped memory for tpu_custom_call.1']
    #allocation10 [shape = 'u8[4096]{0}', space=vmem, size = 0x1000, scoped, tag = 'output window, operand 0, single buffered']
    %11 = vsyncpa [#allocation3], 0
    %12 = vsyncpa [#allocation6], 0
    %13 = vsyncpa [#allocation9], 0
    %14 = vsyncpa [#allocation4], 0
    // Predicated region
    $region2: #{tpu_custom_call.1} parent=1 // pred_check
      _
    $region3: #{tpu_custom_call.1} parent=1 // pred_check_branch
      %16 = sbr.rel (0) target = $region5
    $region4: #{tpu_custom_call.1} parent=1 // pred_region
      %s18 = ssub.s32 2048, 2048
      %19 = vsyncadd [#allocation3], %s18
      %s20 = sshll.u32 [#allocation2], 4
      %s21 = int_to_ptr.vmem [resolvable:$true] %s20
      %26 = dma.hbm_to_vmem [thread:$0]  %s0, 2048, %s21, [#allocation3], 64, 64, 4
    $region5: #{tpu_custom_call.1} parent=1 // pred_fallthru
      _
    // Predicated region
    $region6: #{tpu_custom_call.1} parent=1 // pred_check
      _
    $region7: #{tpu_custom_call.1} parent=1 // pred_check_branch
      %28 = sbr.rel (0) target = $region9
    $region8: #{tpu_custom_call.1} parent=1 // pred_region
      %s30 = ssub.s32 1280, 1280
      %31 = vsyncadd [#allocation6], %s30
      %s32 = sshll.u32 [#allocation5], 4
      %s33 = int_to_ptr.vmem [resolvable:$true] %s32
      %38 = dma.hbm_to_vmem [thread:$0]  %s1, 1280, %s33, [#allocation6], 64, 64, 4
    $region9: #{tpu_custom_call.1} parent=1 // pred_fallthru
      _
    // Predicated region
    $region10: #{tpu_custom_call.1} parent=1 // pred_check
      _
    $region11: #{tpu_custom_call.1} parent=1 // pred_check_branch
      %40 = sbr.rel (0) target = $region13
    $region12: #{tpu_custom_call.1} parent=1 // pred_region
      _
    $region13: #{tpu_custom_call.1} parent=1 // pred_fallthru
      _
    // Predicated region
    $region14: #{tpu_custom_call.1} parent=1 // pred_check
      _
    $region15: #{tpu_custom_call.1} parent=1 // pred_check_branch
      %42 = sbr.rel (0) target = $region17
    $region16: #{tpu_custom_call.1} parent=1 // pred_region
      %s44 = ssub.s32 256, 256
      %45 = vsyncadd [#allocation6], %s44
      %s46 = sshll.u32 [#allocation7], 4
      %s47 = int_to_ptr.vmem [resolvable:$true] %s46
      %52 = dma.hbm_to_vmem [thread:$0]  %s3, 256, %s47, [#allocation6], 128, 128, 8
    $region17: #{tpu_custom_call.1} parent=1 // pred_fallthru
      _
    // Predicated region
    $region18: #{tpu_custom_call.1} parent=1 // pred_check
      _
    $region19: #{tpu_custom_call.1} parent=1 // pred_check_branch
      %54 = sbr.rel (0) target = $region21
    $region20: #{tpu_custom_call.1} parent=1 // pred_region
      %s56 = ssub.s32 1024, 1024
      %57 = vsyncadd [#allocation9], %s56
      %s58 = sshll.u32 [#allocation8], 4
      %s59 = int_to_ptr.vmem [resolvable:$true] %s58
      %64 = dma.hbm_to_vmem [thread:$0]  %s4, 1024, %s59, [#allocation9], 64, 64, 4
    $region21: #{tpu_custom_call.1} parent=1 // pred_fallthru
      _
    // Predicated region
    $region22: #{tpu_custom_call.1} parent=1 // pred_check
      _
    $region23: #{tpu_custom_call.1} parent=1 // pred_check_branch
      %66 = sbr.rel (0) target = $region25
    $region24: #{tpu_custom_call.1} parent=1 // pred_region
      _
    $region25: #{tpu_custom_call.1} parent=1 // pred_fallthru
      _
    // Predicated region
    $region26: #{tpu_custom_call.1} parent=1 // pred_check
      _
    $region27: #{tpu_custom_call.1} parent=1 // pred_check_branch
      %68 = sbr.rel (0) target = $region29
    $region28: #{tpu_custom_call.1} parent=1 // pred_region
      %69 = dma.done [#allocation3], 2048
    $region29: #{tpu_custom_call.1} parent=1 // pred_fallthru
      _
    // Predicated region
    $region30: #{tpu_custom_call.1} parent=1 // pred_check
      _
    $region31: #{tpu_custom_call.1} parent=1 // pred_check_branch
      %71 = sbr.rel (0) target = $region33
    $region32: #{tpu_custom_call.1} parent=1 // pred_region
      %72 = dma.done [#allocation6], 1280
    $region33: #{tpu_custom_call.1} parent=1 // pred_fallthru
      _
    // Predicated region
    $region34: #{tpu_custom_call.1} parent=1 // pred_check
      _
    $region35: #{tpu_custom_call.1} parent=1 // pred_check_branch
      %74 = sbr.rel (0) target = $region37
    $region36: #{tpu_custom_call.1} parent=1 // pred_region
      %75 = dma.done [#allocation6], 256
    $region37: #{tpu_custom_call.1} parent=1 // pred_fallthru
      _
    // Predicated region
    $region38: #{tpu_custom_call.1} parent=1 // pred_check
      _
    $region39: #{tpu_custom_call.1} parent=1 // pred_check_branch
      %77 = sbr.rel (0) target = $region41
    $region40: #{tpu_custom_call.1} parent=1 // pred_region
      %78 = dma.done [#allocation9], 1024
    $region41: #{tpu_custom_call.1} parent=1 // pred_fallthru
      _
    %v80 = vld [vmem:[#allocation2] sm:$0xf]
    %v81 = vld [vmem:[#allocation2 + $0x4] sm:$0xf]
    %v82 = vld [vmem:[#allocation2 + $0x8] sm:$0xf]
    %v83 = vld [vmem:[#allocation2 + $0x10] sm:$0xf]
    %v84 = vld [vmem:[#allocation2 + $0x14] sm:$0xf]
    %v85 = vld [vmem:[#allocation2 + $0x18] sm:$0xf]
    %v86 = vld [vmem:[#allocation2 + $0x20] sm:$0xf]
    %v87 = vld [vmem:[#allocation2 + $0x24] sm:$0xf]
    %v88 = vld [vmem:[#allocation2 + $0x28] sm:$0xf]
    %v89 = vld [vmem:[#allocation2 + $0x30] sm:$0xf]
    %v90 = vld [vmem:[#allocation2 + $0x34] sm:$0xf]
    %v91 = vld [vmem:[#allocation2 + $0x38] sm:$0xf]
    %v92 = vld [vmem:[#allocation2 + $0x40] sm:$0xf]
    %v93 = vld [vmem:[#allocation2 + $0x44] sm:$0xf]
    %v94 = vld [vmem:[#allocation2 + $0x48] sm:$0xf]
    %v95 = vld [vmem:[#allocation2 + $0x50] sm:$0xf]
    %v96 = vld [vmem:[#allocation2 + $0x54] sm:$0xf]
    %v97 = vld [vmem:[#allocation2 + $0x58] sm:$0xf]
    %v98 = vld [vmem:[#allocation2 + $0x60] sm:$0xf]
    %v99 = vld [vmem:[#allocation2 + $0x64] sm:$0xf]
    %v100 = vld [vmem:[#allocation2 + $0x68] sm:$0xf]
    %v101 = vld [vmem:[#allocation2 + $0x70] sm:$0xf]
    %v102 = vld [vmem:[#allocation2 + $0x74] sm:$0xf]
    %v103 = vld [vmem:[#allocation2 + $0x78] sm:$0xf]
    %v104 = vld [vmem:[#allocation5] sm:$0xf]
    %v105 = vld [vmem:[#allocation5 + $0x4] sm:$0xf]
    %v106 = vld [vmem:[#allocation5 + $0x8] sm:$0xf]
    %v107 = vld [vmem:[#allocation5 + $0xc] sm:$0xf]
    %v108 = vld [vmem:[#allocation5 + $0x10] sm:$0xf]
    %v109 = vld [vmem:[#allocation5 + $0x14] sm:$0xf]
    %v110 = vld [vmem:[#allocation5 + $0x18] sm:$0xf]
    %v111 = vld [vmem:[#allocation5 + $0x1c] sm:$0xf]
    %v112 = vld [vmem:[#allocation5 + $0x20] sm:$0xf]
    %v113 = vld [vmem:[#allocation5 + $0x24] sm:$0xf]
    %v114 = vld [vmem:[#allocation5 + $0x28] sm:$0xf]
    %v115 = vld [vmem:[#allocation5 + $0x2c] sm:$0xf]
    %v116 = vld [vmem:[#allocation5 + $0x30] sm:$0xf]
    %v117 = vld [vmem:[#allocation5 + $0x34] sm:$0xf]
    %v118 = vld [vmem:[#allocation5 + $0x38] sm:$0xf]
    %v119 = vld [vmem:[#allocation5 + $0x3c] sm:$0xf]
    %v120 = vld [vmem:[#allocation5 + $0x40] sm:$0xf]
    %v121 = vld [vmem:[#allocation5 + $0x44] sm:$0xf]
    %v122 = vld [vmem:[#allocation5 + $0x48] sm:$0xf]
    %v123 = vld [vmem:[#allocation5 + $0x4c] sm:$0xf]
    %vm124 = vsmask.f32 3328
    %vm125 = vsmask.f32 7440
    %vm126 = vmor %vm124, %vm125
    %v128 = vshrl.u32 %v80, 16
    %v130 = vrot.slane %v128, 4
    %v131 = vshll.u32 %v80, 16
    %v133 = vrot.slane %v131, 5
    %v134 = vor.u32 %v130, %v133
    %v135 = vrot.slane %v134, 4
    %v137 = vshll.u32 %v81, 16
    %v139 = vrot.slane %v137, 5
    %v140 = vsel %vm126, %v135, %v139
    %v141 = vshrl.u32 %v81, 16
    %v143 = vrot.slane %v141, 4
    %v144 = vor.u32 %v143, %v139
    %v145 = vrot.slane %v144, 4
    %v147 = vshll.u32 %v82, 16
    %v149 = vrot.slane %v147, 5
    %v150 = vsel %vm126, %v145, %v149
    %v152 = vshrl.u32 %v83, 16
    %v154 = vrot.slane %v152, 4
    %v155 = vshll.u32 %v83, 16
    %v157 = vrot.slane %v155, 5
    %v158 = vor.u32 %v154, %v157
    %v159 = vrot.slane %v158, 4
    %v161 = vshll.u32 %v84, 16
    %v163 = vrot.slane %v161, 5
    %v164 = vsel %vm126, %v159, %v163
    %v165 = vshrl.u32 %v84, 16
    %v167 = vrot.slane %v165, 4
    %v168 = vor.u32 %v167, %v163
    %v169 = vrot.slane %v168, 4
    %v171 = vshll.u32 %v85, 16
    %v173 = vrot.slane %v171, 5
    %v174 = vsel %vm126, %v169, %v173
    %v176 = vshrl.u32 %v86, 16
    %v178 = vrot.slane %v176, 4
    %v179 = vshll.u32 %v86, 16
    %v181 = vrot.slane %v179, 5
    %v182 = vor.u32 %v178, %v181
    %v183 = vrot.slane %v182, 4
    %v185 = vshll.u32 %v87, 16
    %v187 = vrot.slane %v185, 5
    %v188 = vsel %vm126, %v183, %v187
    %v189 = vshrl.u32 %v87, 16
    %v191 = vrot.slane %v189, 4
    %v192 = vor.u32 %v191, %v187
    %v193 = vrot.slane %v192, 4
    %v195 = vshll.u32 %v88, 16
    %v197 = vrot.slane %v195, 5
    %v198 = vsel %vm126, %v193, %v197
    %v200 = vshrl.u32 %v89, 16
    %v202 = vrot.slane %v200, 4
    %v203 = vshll.u32 %v89, 16
    %v205 = vrot.slane %v203, 5
    %v206 = vor.u32 %v202, %v205
    %v207 = vrot.slane %v206, 4
    %v209 = vshll.u32 %v90, 16
    %v211 = vrot.slane %v209, 5
    %v212 = vsel %vm126, %v207, %v211
    %v213 = vshrl.u32 %v90, 16
    %v215 = vrot.slane %v213, 4
    %v216 = vor.u32 %v215, %v211
    %v217 = vrot.slane %v216, 4
    %v219 = vshll.u32 %v91, 16
    %v221 = vrot.slane %v219, 5
    %v222 = vsel %vm126, %v217, %v221
    %v224 = vshrl.u32 %v92, 16
    %v226 = vrot.slane %v224, 4
    %v227 = vshll.u32 %v92, 16
    %v229 = vrot.slane %v227, 5
    %v230 = vor.u32 %v226, %v229
    %v231 = vrot.slane %v230, 4
    %v233 = vshll.u32 %v93, 16
    %v235 = vrot.slane %v233, 5
    %v236 = vsel %vm126, %v231, %v235
    %v237 = vshrl.u32 %v93, 16
    %v239 = vrot.slane %v237, 4
    %v240 = vor.u32 %v239, %v235
    %v241 = vrot.slane %v240, 4
    %v243 = vshll.u32 %v94, 16
    %v245 = vrot.slane %v243, 5
    %v246 = vsel %vm126, %v241, %v245
    %v248 = vshrl.u32 %v95, 16
    %v250 = vrot.slane %v248, 4
    %v251 = vshll.u32 %v95, 16
    %v253 = vrot.slane %v251, 5
    %v254 = vor.u32 %v250, %v253
    %v255 = vrot.slane %v254, 4
    %v257 = vshll.u32 %v96, 16
    %v259 = vrot.slane %v257, 5
    %v260 = vsel %vm126, %v255, %v259
    %v261 = vshrl.u32 %v96, 16
    %v263 = vrot.slane %v261, 4
    %v264 = vor.u32 %v263, %v259
    %v265 = vrot.slane %v264, 4
    %v267 = vshll.u32 %v97, 16
    %v269 = vrot.slane %v267, 5
    %v270 = vsel %vm126, %v265, %v269
    %v272 = vshrl.u32 %v98, 16
    %v274 = vrot.slane %v272, 4
    %v275 = vshll.u32 %v98, 16
    %v277 = vrot.slane %v275, 5
    %v278 = vor.u32 %v274, %v277
    %v279 = vrot.slane %v278, 4
    %v281 = vshll.u32 %v99, 16
    %v283 = vrot.slane %v281, 5
    %v284 = vsel %vm126, %v279, %v283
    %v285 = vshrl.u32 %v99, 16
    %v287 = vrot.slane %v285, 4
    %v288 = vor.u32 %v287, %v283
    %v289 = vrot.slane %v288, 4
    %v291 = vshll.u32 %v100, 16
    %v293 = vrot.slane %v291, 5
    %v294 = vsel %vm126, %v289, %v293
    %v296 = vshrl.u32 %v101, 16
    %v298 = vrot.slane %v296, 4
    %v299 = vshll.u32 %v101, 16
    %v301 = vrot.slane %v299, 5
    %v302 = vor.u32 %v298, %v301
    %v303 = vrot.slane %v302, 4
    %v305 = vshll.u32 %v102, 16
    %v307 = vrot.slane %v305, 5
    %v308 = vsel %vm126, %v303, %v307
    %v309 = vshrl.u32 %v102, 16
    %v311 = vrot.slane %v309, 4
    %v312 = vor.u32 %v311, %v307
    %v313 = vrot.slane %v312, 4
    %v315 = vshll.u32 %v103, 16
    %v317 = vrot.slane %v315, 5
    %v318 = vsel %vm126, %v313, %v317
    %v319 = vunpack.c.l.b16 %v140
    %v320 = vunpack.c.l.b16 %v150
    %v321 = vunpack.c.l.b16 %v164
    %v322 = vunpack.c.l.b16 %v174
    %v323 = vunpack.c.l.b16 %v188
    %v324 = vunpack.c.l.b16 %v198
    %v325 = vunpack.c.l.b16 %v212
    %v326 = vunpack.c.l.b16 %v222
    %v327 = vunpack.c.l.b16 %v236
    %v328 = vunpack.c.l.b16 %v246
    %v329 = vunpack.c.l.b16 %v260
    %v330 = vunpack.c.l.b16 %v270
    %v331 = vunpack.c.l.b16 %v284
    %v332 = vunpack.c.l.b16 %v294
    %v333 = vunpack.c.l.b16 %v308
    %v334 = vunpack.c.l.b16 %v318
    %v335 = vpack.c.b16 %v320, %v319
    %v336 = vpack.c.b16 %v322, %v321
    %v337 = vpack.c.b16 %v324, %v323
    %v338 = vpack.c.b16 %v326, %v325
    %v339 = vpack.c.b16 %v328, %v327
    %v340 = vpack.c.b16 %v330, %v329
    %v341 = vpack.c.b16 %v332, %v331
    %v342 = vpack.c.b16 %v334, %v333
    %v347 = vunpack.c.l.b16 %v108
    %v348 = vunpack.c.l.b16 %v109
    %v349 = vunpack.c.l.b16 %v110
    %v350 = vunpack.c.l.b16 %v111
    %v351 = vpack.c.b16 %v348, %v347
    %v352 = vpack.c.b16 %v350, %v349
    %vm355 = vcmask 261120
    %v357 = vsel %vm355, %v335, 0
    %v360 = vsel %vm355, %v336, 0
    %v363 = vsel %vm355, %v337, 0
    %v366 = vsel %vm355, %v338, 0
    %v369 = vsel %vm355, %v339, 0
    %v372 = vsel %vm355, %v340, 0
    %v375 = vsel %vm355, %v341, 0
    %v378 = vsel %vm355, %v342, 0
    %380 = vmatprep.subr.bf16.mxu0 0
    %381 = vmatpush1.bf16.msra.mxu0 %v351
    %382 = vmatprep.subr.bf16.mxu0 0
    %383 = vmatpush1.bf16.msra.mxu0 %v352
    %384 = vmatprep.subr.bf16.mxu0 0
    %385 = vmatpush1.bf16.msra.mxu0 0
    %386 = vmatprep.subr.bf16.mxu0 0
    %387 = vmatpush1.bf16.msra.mxu0 0
    %388 = vmatprep.subr.bf16.mxu0 0
    %389 = vmatpush1.bf16.msra.mxu0 0
    %390 = vmatprep.subr.bf16.mxu0 0
    %391 = vmatpush1.bf16.msra.mxu0 0
    %392 = vmatprep.subr.bf16.mxu0 0
    %393 = vmatpush1.bf16.msra.mxu0 0
    %394 = vmatprep.subr.bf16.mxu0 0
    %395 = vmatpush1.bf16.msra.mxu0 0
    %396 = vmatprep.subr.bf16.mxu0 0
    %397 = vmatpush1.bf16.msra.mxu0 0
    %398 = vmatprep.subr.bf16.mxu0 0
    %399 = vmatpush1.bf16.msra.mxu0 0
    %400 = vmatprep.subr.bf16.mxu0 0
    %401 = vmatpush1.bf16.msra.mxu0 0
    %402 = vmatprep.subr.bf16.mxu0 0
    %403 = vmatpush1.bf16.msra.mxu0 0
    %404 = vmatprep.subr.bf16.mxu0 0
    %405 = vmatpush1.bf16.msra.mxu0 0
    %406 = vmatprep.subr.bf16.mxu0 0
    %407 = vmatpush1.bf16.msra.mxu0 0
    %408 = vmatprep.subr.bf16.mxu0 0
    %409 = vmatpush1.bf16.msra.mxu0 0
    %410 = vmatprep.subr.bf16.mxu0 0
    %411 = vmatpush1.bf16.msra.mxu0 0
    %412 = vmatprep.mubr.bf16.mxu0 0
    %413 = vmatmul.mubr.bf16.gmra.mrb[0].mxu0 %v357
    %v414 = vpop.f32.mrb[0].mxu0
    %v415 = vadd.f32 0.0, %v414
    %v416 = vpop.f32.mrb[0].mxu0
    %v417 = vpop.f32.mrb[0].mxu0
    %v418 = vadd.f32 0.0, %v417
    %v419 = vpop.f32.mrb[0].mxu0
    %420 = vmatprep.mubr.bf16.mxu0 0
    %421 = vmatmul.mubr.bf16.gmra.mrb[0].mxu0 %v360
    %v422 = vpop.f32.mrb[0].mxu0
    %v423 = vadd.f32 0.0, %v422
    %v424 = vpop.f32.mrb[0].mxu0
    %v425 = vpop.f32.mrb[0].mxu0
    %v426 = vadd.f32 0.0, %v425
    %v427 = vpop.f32.mrb[0].mxu0
    %428 = vmatprep.mubr.bf16.mxu0 0
    %429 = vmatmul.mubr.bf16.gmra.mrb[0].mxu0 %v363
    %v430 = vpop.f32.mrb[0].mxu0
    %v431 = vadd.f32 0.0, %v430
    %v432 = vpop.f32.mrb[0].mxu0
    %v433 = vpop.f32.mrb[0].mxu0
    %v434 = vadd.f32 0.0, %v433
    %v435 = vpop.f32.mrb[0].mxu0
    %436 = vmatprep.mubr.bf16.mxu0 0
    %437 = vmatmul.mubr.bf16.gmra.mrb[0].mxu0 %v366
    %v438 = vpop.f32.mrb[0].mxu0
    %v439 = vadd.f32 0.0, %v438
    %v440 = vpop.f32.mrb[0].mxu0
    %v441 = vpop.f32.mrb[0].mxu0
    %v442 = vadd.f32 0.0, %v441
    %v443 = vpop.f32.mrb[0].mxu0
    %444 = vmatprep.mubr.bf16.mxu0 0
    %445 = vmatmul.mubr.bf16.gmra.mrb[0].mxu0 %v369
    %v446 = vpop.f32.mrb[0].mxu0
    %v447 = vadd.f32 0.0, %v446
    %v448 = vpop.f32.mrb[0].mxu0
    %v449 = vpop.f32.mrb[0].mxu0
    %v450 = vadd.f32 0.0, %v449
    %v451 = vpop.f32.mrb[0].mxu0
    %452 = vmatprep.mubr.bf16.mxu0 0
    %453 = vmatmul.mubr.bf16.gmra.mrb[0].mxu0 %v372
    %v454 = vpop.f32.mrb[0].mxu0
    %v455 = vadd.f32 0.0, %v454
    %v456 = vpop.f32.mrb[0].mxu0
    %v457 = vpop.f32.mrb[0].mxu0
    %v458 = vadd.f32 0.0, %v457
    %v459 = vpop.f32.mrb[0].mxu0
    %460 = vmatprep.mubr.bf16.mxu0 0
    %461 = vmatmul.mubr.bf16.gmra.mrb[0].mxu0 %v375
    %v462 = vpop.f32.mrb[0].mxu0
    %v463 = vadd.f32 0.0, %v462
    %v464 = vpop.f32.mrb[0].mxu0
    %v465 = vpop.f32.mrb[0].mxu0
    %v466 = vadd.f32 0.0, %v465
    %v467 = vpop.f32.mrb[0].mxu0
    %468 = vmatprep.mubr.bf16.mxu0 0
    %469 = vmatmul.mubr.bf16.gmra.mrb[0].mxu0 %v378
    %v470 = vpop.f32.mrb[0].mxu0
    %v471 = vadd.f32 0.0, %v470
    %v472 = vpop.f32.mrb[0].mxu0
    %v473 = vpop.f32.mrb[0].mxu0
    %v474 = vadd.f32 0.0, %v473
    %v475 = vpop.f32.mrb[0].mxu0
    %476 = vdwg.mxu0
    %v493 = vunpack.c.l.b16 %v80
    %v494 = vunpack.c.l.b16 %v81
    %v495 = vunpack.c.l.b16 %v83
    %v496 = vunpack.c.l.b16 %v84
    %v497 = vunpack.c.l.b16 %v86
    %v498 = vunpack.c.l.b16 %v87
    %v499 = vunpack.c.l.b16 %v89
    %v500 = vunpack.c.l.b16 %v90
    %v501 = vunpack.c.l.b16 %v92
    %v502 = vunpack.c.l.b16 %v93
    %v503 = vunpack.c.l.b16 %v95
    %v504 = vunpack.c.l.b16 %v96
    %v505 = vunpack.c.l.b16 %v98
    %v506 = vunpack.c.l.b16 %v99
    %v507 = vunpack.c.l.b16 %v101
    %v508 = vunpack.c.l.b16 %v102
    %v509 = vpack.c.b16 %v494, %v493
    %v510 = vpack.c.b16 %v496, %v495
    %v511 = vpack.c.b16 %v498, %v497
    %v512 = vpack.c.b16 %v500, %v499
    %v513 = vpack.c.b16 %v502, %v501
    %v514 = vpack.c.b16 %v504, %v503
    %v515 = vpack.c.b16 %v506, %v505
    %v516 = vpack.c.b16 %v508, %v507
    %v521 = vunpack.c.l.b16 %v104
    %v522 = vunpack.c.l.b16 %v105
    %v523 = vunpack.c.l.b16 %v106
    %v524 = vunpack.c.l.b16 %v107
    %v525 = vpack.c.b16 %v522, %v521
    %v526 = vpack.c.b16 %v524, %v523
    %v530 = vsel %vm355, %v509, 0
    %v533 = vsel %vm355, %v510, 0
    %v536 = vsel %vm355, %v511, 0
    %v539 = vsel %vm355, %v512, 0
    %v542 = vsel %vm355, %v513, 0
    %v545 = vsel %vm355, %v514, 0
    %v548 = vsel %vm355, %v515, 0
    %v551 = vsel %vm355, %v516, 0
    %553 = vmatprep.subr.bf16.mxu0 0
    %554 = vmatpush1.bf16.msra.mxu0 %v525
    %555 = vmatprep.subr.bf16.mxu0 0
    %556 = vmatpush1.bf16.msra.mxu0 %v526
    %557 = vmatprep.subr.bf16.mxu0 0
    %558 = vmatpush1.bf16.msra.mxu0 0
    %559 = vmatprep.subr.bf16.mxu0 0
    %560 = vmatpush1.bf16.msra.mxu0 0
    %561 = vmatprep.subr.bf16.mxu0 0
    %562 = vmatpush1.bf16.msra.mxu0 0
    %563 = vmatprep.subr.bf16.mxu0 0
    %564 = vmatpush1.bf16.msra.mxu0 0
    %565 = vmatprep.subr.bf16.mxu0 0
    %566 = vmatpush1.bf16.msra.mxu0 0
    %567 = vmatprep.subr.bf16.mxu0 0
    %568 = vmatpush1.bf16.msra.mxu0 0
    %569 = vmatprep.subr.bf16.mxu0 0
    %570 = vmatpush1.bf16.msra.mxu0 0
    %571 = vmatprep.subr.bf16.mxu0 0
    %572 = vmatpush1.bf16.msra.mxu0 0
    %573 = vmatprep.subr.bf16.mxu0 0
    %574 = vmatpush1.bf16.msra.mxu0 0
    %575 = vmatprep.subr.bf16.mxu0 0
    %576 = vmatpush1.bf16.msra.mxu0 0
    %577 = vmatprep.subr.bf16.mxu0 0
    %578 = vmatpush1.bf16.msra.mxu0 0
    %579 = vmatprep.subr.bf16.mxu0 0
    %580 = vmatpush1.bf16.msra.mxu0 0
    %581 = vmatprep.subr.bf16.mxu0 0
    %582 = vmatpush1.bf16.msra.mxu0 0
    %583 = vmatprep.subr.bf16.mxu0 0
    %584 = vmatpush1.bf16.msra.mxu0 0
    %585 = vmatprep.mubr.bf16.mxu0 0
    %586 = vmatmul.mubr.bf16.gmra.mrb[0].mxu0 %v530
    %v587 = vpop.f32.mrb[0].mxu0
    %v588 = vadd.f32 %v415, %v587
    %v589 = vpop.f32.mrb[0].mxu0
    %v590 = vpop.f32.mrb[0].mxu0
    %v591 = vadd.f32 %v418, %v590
    %v592 = vpop.f32.mrb[0].mxu0
    %593 = vmatprep.mubr.bf16.mxu0 0
    %594 = vmatmul.mubr.bf16.gmra.mrb[0].mxu0 %v533
    %v595 = vpop.f32.mrb[0].mxu0
    %v596 = vadd.f32 %v423, %v595
    %v597 = vpop.f32.mrb[0].mxu0
    %v598 = vpop.f32.mrb[0].mxu0
    %v599 = vadd.f32 %v426, %v598
    %v600 = vpop.f32.mrb[0].mxu0
    %601 = vmatprep.mubr.bf16.mxu0 0
    %602 = vmatmul.mubr.bf16.gmra.mrb[0].mxu0 %v536
    %v603 = vpop.f32.mrb[0].mxu0
    %v604 = vadd.f32 %v431, %v603
    %v605 = vpop.f32.mrb[0].mxu0
    %v606 = vpop.f32.mrb[0].mxu0
    %v607 = vadd.f32 %v434, %v606
    %v608 = vpop.f32.mrb[0].mxu0
    %609 = vmatprep.mubr.bf16.mxu0 0
    %610 = vmatmul.mubr.bf16.gmra.mrb[0].mxu0 %v539
    %v611 = vpop.f32.mrb[0].mxu0
    %v612 = vadd.f32 %v439, %v611
    %v613 = vpop.f32.mrb[0].mxu0
    %v614 = vpop.f32.mrb[0].mxu0
    %v615 = vadd.f32 %v442, %v614
    %v616 = vpop.f32.mrb[0].mxu0
    %617 = vmatprep.mubr.bf16.mxu0 0
    %618 = vmatmul.mubr.bf16.gmra.mrb[0].mxu0 %v542
    %v619 = vpop.f32.mrb[0].mxu0
    %v620 = vadd.f32 %v447, %v619
    %v621 = vpop.f32.mrb[0].mxu0
    %v622 = vpop.f32.mrb[0].mxu0
    %v623 = vadd.f32 %v450, %v622
    %v624 = vpop.f32.mrb[0].mxu0
    %625 = vmatprep.mubr.bf16.mxu0 0
    %626 = vmatmul.mubr.bf16.gmra.mrb[0].mxu0 %v545
    %v627 = vpop.f32.mrb[0].mxu0
    %v628 = vadd.f32 %v455, %v627
    %v629 = vpop.f32.mrb[0].mxu0
    %v630 = vpop.f32.mrb[0].mxu0
    %v631 = vadd.f32 %v458, %v630
    %v632 = vpop.f32.mrb[0].mxu0
    %633 = vmatprep.mubr.bf16.mxu0 0
    %634 = vmatmul.mubr.bf16.gmra.mrb[0].mxu0 %v548
    %v635 = vpop.f32.mrb[0].mxu0
    %v636 = vadd.f32 %v463, %v635
    %v637 = vpop.f32.mrb[0].mxu0
    %v638 = vpop.f32.mrb[0].mxu0
    %v639 = vadd.f32 %v466, %v638
    %v640 = vpop.f32.mrb[0].mxu0
    %641 = vmatprep.mubr.bf16.mxu0 0
    %642 = vmatmul.mubr.bf16.gmra.mrb[0].mxu0 %v551
    %v643 = vpop.f32.mrb[0].mxu0
    %v644 = vadd.f32 %v471, %v643
    %v645 = vpop.f32.mrb[0].mxu0
    %v646 = vpop.f32.mrb[0].mxu0
    %v647 = vadd.f32 %v474, %v646
    %v648 = vpop.f32.mrb[0].mxu0
    %649 = vdwg.mxu0
    %vm658 = vcmask 1042432
    %vm659 = vcmask 1046532
    %vm660 = vmor %vm658, %vm659
    %v661 = vrot.slane %v80, 5
    %v662 = vrot.slane %v661, 4
    %v663 = vrot.slane %v81, 5
    %v664 = vsel %vm660, %v662, %v663
    %v665 = vrot.slane %v663, 4
    %v666 = vrot.slane %v82, 5
    %v667 = vsel %vm660, %v665, %v666
    %v668 = vrot.slane %v83, 5
    %v669 = vrot.slane %v668, 4
    %v670 = vrot.slane %v84, 5
    %v671 = vsel %vm660, %v669, %v670
    %v672 = vrot.slane %v670, 4
    %v673 = vrot.slane %v85, 5
    %v674 = vsel %vm660, %v672, %v673
    %v675 = vrot.slane %v86, 5
    %v676 = vrot.slane %v675, 4
    %v677 = vrot.slane %v87, 5
    %v678 = vsel %vm660, %v676, %v677
    %v679 = vrot.slane %v677, 4
    %v680 = vrot.slane %v88, 5
    %v681 = vsel %vm660, %v679, %v680
    %v682 = vrot.slane %v89, 5
    %v683 = vrot.slane %v682, 4
    %v684 = vrot.slane %v90, 5
    %v685 = vsel %vm660, %v683, %v684
    %v686 = vrot.slane %v684, 4
    %v687 = vrot.slane %v91, 5
    %v688 = vsel %vm660, %v686, %v687
    %v689 = vrot.slane %v92, 5
    %v690 = vrot.slane %v689, 4
    %v691 = vrot.slane %v93, 5
    %v692 = vsel %vm660, %v690, %v691
    %v693 = vrot.slane %v691, 4
    %v694 = vrot.slane %v94, 5
    %v695 = vsel %vm660, %v693, %v694
    %v696 = vrot.slane %v95, 5
    %v697 = vrot.slane %v696, 4
    %v698 = vrot.slane %v96, 5
    %v699 = vsel %vm660, %v697, %v698
    %v700 = vrot.slane %v698, 4
    %v701 = vrot.slane %v97, 5
    %v702 = vsel %vm660, %v700, %v701
    %v703 = vrot.slane %v98, 5
    %v704 = vrot.slane %v703, 4
    %v705 = vrot.slane %v99, 5
    %v706 = vsel %vm660, %v704, %v705
    %v707 = vrot.slane %v705, 4
    %v708 = vrot.slane %v100, 5
    %v709 = vsel %vm660, %v707, %v708
    %v710 = vrot.slane %v101, 5
    %v711 = vrot.slane %v710, 4
    %v712 = vrot.slane %v102, 5
    %v713 = vsel %vm660, %v711, %v712
    %v714 = vrot.slane %v712, 4
    %v715 = vrot.slane %v103, 5
    %v716 = vsel %vm660, %v714, %v715
    %v717 = vunpack.c.l.b16 %v664
    %v718 = vunpack.c.l.b16 %v667
    %v719 = vunpack.c.l.b16 %v671
    %v720 = vunpack.c.l.b16 %v674
    %v721 = vunpack.c.l.b16 %v678
    %v722 = vunpack.c.l.b16 %v681
    %v723 = vunpack.c.l.b16 %v685
    %v724 = vunpack.c.l.b16 %v688
    %v725 = vunpack.c.l.b16 %v692
    %v726 = vunpack.c.l.b16 %v695
    %v727 = vunpack.c.l.b16 %v699
    %v728 = vunpack.c.l.b16 %v702
    %v729 = vunpack.c.l.b16 %v706
    %v730 = vunpack.c.l.b16 %v709
    %v731 = vunpack.c.l.b16 %v713
    %v732 = vunpack.c.l.b16 %v716
    %v733 = vpack.c.b16 %v718, %v717
    %v734 = vpack.c.b16 %v720, %v719
    %v735 = vpack.c.b16 %v722, %v721
    %v736 = vpack.c.b16 %v724, %v723
    %v737 = vpack.c.b16 %v726, %v725
    %v738 = vpack.c.b16 %v728, %v727
    %v739 = vpack.c.b16 %v730, %v729
    %v740 = vpack.c.b16 %v732, %v731
    %v745 = vunpack.c.l.b16 %v112
    %v746 = vunpack.c.l.b16 %v113
    %v747 = vunpack.c.l.b16 %v114
    %v748 = vunpack.c.l.b16 %v115
    %v749 = vpack.c.b16 %v746, %v745
    %v750 = vpack.c.b16 %v748, %v747
    %v754 = vsel %vm355, %v733, 0
    %v757 = vsel %vm355, %v734, 0
    %v760 = vsel %vm355, %v735, 0
    %v763 = vsel %vm355, %v736, 0
    %v766 = vsel %vm355, %v737, 0
    %v769 = vsel %vm355, %v738, 0
    %v772 = vsel %vm355, %v739, 0
    %v775 = vsel %vm355, %v740, 0
    %777 = vmatprep.subr.bf16.mxu0 0
    %778 = vmatpush1.bf16.msra.mxu0 %v749
    %779 = vmatprep.subr.bf16.mxu0 0
    %780 = vmatpush1.bf16.msra.mxu0 %v750
    %781 = vmatprep.subr.bf16.mxu0 0
    %782 = vmatpush1.bf16.msra.mxu0 0
    %783 = vmatprep.subr.bf16.mxu0 0
    %784 = vmatpush1.bf16.msra.mxu0 0
    %785 = vmatprep.subr.bf16.mxu0 0
    %786 = vmatpush1.bf16.msra.mxu0 0
    %787 = vmatprep.subr.bf16.mxu0 0
    %788 = vmatpush1.bf16.msra.mxu0 0
    %789 = vmatprep.subr.bf16.mxu0 0
    %790 = vmatpush1.bf16.msra.mxu0 0
    %791 = vmatprep.subr.bf16.mxu0 0
    %792 = vmatpush1.bf16.msra.mxu0 0
    %793 = vmatprep.subr.bf16.mxu0 0
    %794 = vmatpush1.bf16.msra.mxu0 0
    %795 = vmatprep.subr.bf16.mxu0 0
    %796 = vmatpush1.bf16.msra.mxu0 0
    %797 = vmatprep.subr.bf16.mxu0 0
    %798 = vmatpush1.bf16.msra.mxu0 0
    %799 = vmatprep.subr.bf16.mxu0 0
    %800 = vmatpush1.bf16.msra.mxu0 0
    %801 = vmatprep.subr.bf16.mxu0 0
    %802 = vmatpush1.bf16.msra.mxu0 0
    %803 = vmatprep.subr.bf16.mxu0 0
    %804 = vmatpush1.bf16.msra.mxu0 0
    %805 = vmatprep.subr.bf16.mxu0 0
    %806 = vmatpush1.bf16.msra.mxu0 0
    %807 = vmatprep.subr.bf16.mxu0 0
    %808 = vmatpush1.bf16.msra.mxu0 0
    %809 = vmatprep.mubr.bf16.mxu0 0
    %810 = vmatmul.mubr.bf16.gmra.mrb[0].mxu0 %v754
    %v811 = vpop.f32.mrb[0].mxu0
    %v812 = vadd.f32 0.0, %v811
    %v813 = vpop.f32.mrb[0].mxu0
    %v814 = vpop.f32.mrb[0].mxu0
    %v815 = vadd.f32 0.0, %v814
    %v816 = vpop.f32.mrb[0].mxu0
    %817 = vmatprep.mubr.bf16.mxu0 0
    %818 = vmatmul.mubr.bf16.gmra.mrb[0].mxu0 %v757
    %v819 = vpop.f32.mrb[0].mxu0
    %v820 = vadd.f32 0.0, %v819
    %v821 = vpop.f32.mrb[0].mxu0
    %v822 = vpop.f32.mrb[0].mxu0
    %v823 = vadd.f32 0.0, %v822
    %v824 = vpop.f32.mrb[0].mxu0
    %825 = vmatprep.mubr.bf16.mxu0 0
    %826 = vmatmul.mubr.bf16.gmra.mrb[0].mxu0 %v760
    %v827 = vpop.f32.mrb[0].mxu0
    %v828 = vadd.f32 0.0, %v827
    %v829 = vpop.f32.mrb[0].mxu0
    %v830 = vpop.f32.mrb[0].mxu0
    %v831 = vadd.f32 0.0, %v830
    %v832 = vpop.f32.mrb[0].mxu0
    %833 = vmatprep.mubr.bf16.mxu0 0
    %834 = vmatmul.mubr.bf16.gmra.mrb[0].mxu0 %v763
    %v835 = vpop.f32.mrb[0].mxu0
    %v836 = vadd.f32 0.0, %v835
    %v837 = vpop.f32.mrb[0].mxu0
    %v838 = vpop.f32.mrb[0].mxu0
    %v839 = vadd.f32 0.0, %v838
    %v840 = vpop.f32.mrb[0].mxu0
    %841 = vmatprep.mubr.bf16.mxu0 0
    %842 = vmatmul.mubr.bf16.gmra.mrb[0].mxu0 %v766
    %v843 = vpop.f32.mrb[0].mxu0
    %v844 = vadd.f32 0.0, %v843
    %v845 = vpop.f32.mrb[0].mxu0
    %v846 = vpop.f32.mrb[0].mxu0
    %v847 = vadd.f32 0.0, %v846
    %v848 = vpop.f32.mrb[0].mxu0
    %849 = vmatprep.mubr.bf16.mxu0 0
    %850 = vmatmul.mubr.bf16.gmra.mrb[0].mxu0 %v769
    %v851 = vpop.f32.mrb[0].mxu0
    %v852 = vadd.f32 0.0, %v851
    %v853 = vpop.f32.mrb[0].mxu0
    %v854 = vpop.f32.mrb[0].mxu0
    %v855 = vadd.f32 0.0, %v854
    %v856 = vpop.f32.mrb[0].mxu0
    %857 = vmatprep.mubr.bf16.mxu0 0
    %858 = vmatmul.mubr.bf16.gmra.mrb[0].mxu0 %v772
    %v859 = vpop.f32.mrb[0].mxu0
    %v860 = vadd.f32 0.0, %v859
    %v861 = vpop.f32.mrb[0].mxu0
    %v862 = vpop.f32.mrb[0].mxu0
    %v863 = vadd.f32 0.0, %v862
    %v864 = vpop.f32.mrb[0].mxu0
    %865 = vmatprep.mubr.bf16.mxu0 0
    %866 = vmatmul.mubr.bf16.gmra.mrb[0].mxu0 %v775
    %v867 = vpop.f32.mrb[0].mxu0
    %v868 = vadd.f32 0.0, %v867
    %v869 = vpop.f32.mrb[0].mxu0
    %v870 = vpop.f32.mrb[0].mxu0
    %v871 = vadd.f32 0.0, %v870
    %v872 = vpop.f32.mrb[0].mxu0
    %873 = vdwg.mxu0
    %v874 = vadd.f32 %v588, %v812
    %v875 = vadd.f32 %v591, %v815
    %v876 = vadd.f32 %v596, %v820
    %v877 = vadd.f32 %v599, %v823
    %v878 = vadd.f32 %v604, %v828
    %v879 = vadd.f32 %v607, %v831
    %v880 = vadd.f32 %v612, %v836
    %v881 = vadd.f32 %v615, %v839
    %v882 = vadd.f32 %v620, %v844
    %v883 = vadd.f32 %v623, %v847
    %v884 = vadd.f32 %v628, %v852
    %v885 = vadd.f32 %v631, %v855
    %v886 = vadd.f32 %v636, %v860
    %v887 = vadd.f32 %v639, %v863
    %v888 = vadd.f32 %v644, %v868
    %v889 = vadd.f32 %v647, %v871
    %vm890 = vsmask.f32 2304
    %vm891 = vsmask.f32 6416
    %vm892 = vmor %vm890, %vm891
    %v893 = vrot.slane %v128, 5
    %v894 = vrot.slane %v131, 6
    %v895 = vor.u32 %v893, %v894
    %v896 = vrot.slane %v895, 4
    %v897 = vrot.slane %v141, 5
    %v898 = vrot.slane %v137, 6
    %v899 = vor.u32 %v897, %v898
    %v900 = vsel %vm892, %v896, %v899
    %v901 = vrot.slane %v899, 4
    %v902 = vshrl.u32 %v82, 16
    %v904 = vrot.slane %v902, 5
    %v905 = vrot.slane %v147, 6
    %v906 = vor.u32 %v904, %v905
    %v907 = vsel %vm892, %v901, %v906
    %v908 = vrot.slane %v152, 5
    %v909 = vrot.slane %v155, 6
    %v910 = vor.u32 %v908, %v909
    %v911 = vrot.slane %v910, 4
    %v912 = vrot.slane %v165, 5
    %v913 = vrot.slane %v161, 6
    %v914 = vor.u32 %v912, %v913
    %v915 = vsel %vm892, %v911, %v914
    %v916 = vrot.slane %v914, 4
    %v917 = vshrl.u32 %v85, 16
    %v919 = vrot.slane %v917, 5
    %v920 = vrot.slane %v171, 6
    %v921 = vor.u32 %v919, %v920
    %v922 = vsel %vm892, %v916, %v921
    %v923 = vrot.slane %v176, 5
    %v924 = vrot.slane %v179, 6
    %v925 = vor.u32 %v923, %v924
    %v926 = vrot.slane %v925, 4
    %v927 = vrot.slane %v189, 5
    %v928 = vrot.slane %v185, 6
    %v929 = vor.u32 %v927, %v928
    %v930 = vsel %vm892, %v926, %v929
    %v931 = vrot.slane %v929, 4
    %v932 = vshrl.u32 %v88, 16
    %v934 = vrot.slane %v932, 5
    %v935 = vrot.slane %v195, 6
    %v936 = vor.u32 %v934, %v935
    %v937 = vsel %vm892, %v931, %v936
    %v938 = vrot.slane %v200, 5
    %v939 = vrot.slane %v203, 6
    %v940 = vor.u32 %v938, %v939
    %v941 = vrot.slane %v940, 4
    %v942 = vrot.slane %v213, 5
    %v943 = vrot.slane %v209, 6
    %v944 = vor.u32 %v942, %v943
    %v945 = vsel %vm892, %v941, %v944
    %v946 = vrot.slane %v944, 4
    %v947 = vshrl.u32 %v91, 16
    %v949 = vrot.slane %v947, 5
    %v950 = vrot.slane %v219, 6
    %v951 = vor.u32 %v949, %v950
    %v952 = vsel %vm892, %v946, %v951
    %v953 = vrot.slane %v224, 5
    %v954 = vrot.slane %v227, 6
    %v955 = vor.u32 %v953, %v954
    %v956 = vrot.slane %v955, 4
    %v957 = vrot.slane %v237, 5
    %v958 = vrot.slane %v233, 6
    %v959 = vor.u32 %v957, %v958
    %v960 = vsel %vm892, %v956, %v959
    %v961 = vrot.slane %v959, 4
    %v962 = vshrl.u32 %v94, 16
    %v964 = vrot.slane %v962, 5
    %v965 = vrot.slane %v243, 6
    %v966 = vor.u32 %v964, %v965
    %v967 = vsel %vm892, %v961, %v966
    %v968 = vrot.slane %v248, 5
    %v969 = vrot.slane %v251, 6
    %v970 = vor.u32 %v968, %v969
    %v971 = vrot.slane %v970, 4
    %v972 = vrot.slane %v261, 5
    %v973 = vrot.slane %v257, 6
    %v974 = vor.u32 %v972, %v973
    %v975 = vsel %vm892, %v971, %v974
    %v976 = vrot.slane %v974, 4
    %v977 = vshrl.u32 %v97, 16
    %v979 = vrot.slane %v977, 5
    %v980 = vrot.slane %v267, 6
    %v981 = vor.u32 %v979, %v980
    %v982 = vsel %vm892, %v976, %v981
    %v983 = vrot.slane %v272, 5
    %v984 = vrot.slane %v275, 6
    %v985 = vor.u32 %v983, %v984
    %v986 = vrot.slane %v985, 4
    %v987 = vrot.slane %v285, 5
    %v988 = vrot.slane %v281, 6
    %v989 = vor.u32 %v987, %v988
    %v990 = vsel %vm892, %v986, %v989
    %v991 = vrot.slane %v989, 4
    %v992 = vshrl.u32 %v100, 16
    %v994 = vrot.slane %v992, 5
    %v995 = vrot.slane %v291, 6
    %v996 = vor.u32 %v994, %v995
    %v997 = vsel %vm892, %v991, %v996
    %v998 = vrot.slane %v296, 5
    %v999 = vrot.slane %v299, 6
    %v1000 = vor.u32 %v998, %v999
    %v1001 = vrot.slane %v1000, 4
    %v1002 = vrot.slane %v309, 5
    %v1003 = vrot.slane %v305, 6
    %v1004 = vor.u32 %v1002, %v1003
    %v1005 = vsel %vm892, %v1001, %v1004
    %v1006 = vrot.slane %v1004, 4
    %v1007 = vshrl.u32 %v103, 16
    %v1009 = vrot.slane %v1007, 5
    %v1010 = vrot.slane %v315, 6
    %v1011 = vor.u32 %v1009, %v1010
    %v1012 = vsel %vm892, %v1006, %v1011
    %v1013 = vunpack.c.l.b16 %v900
    %v1014 = vunpack.c.l.b16 %v907
    %v1015 = vunpack.c.l.b16 %v915
    %v1016 = vunpack.c.l.b16 %v922
    %v1017 = vunpack.c.l.b16 %v930
    %v1018 = vunpack.c.l.b16 %v937
    %v1019 = vunpack.c.l.b16 %v945
    %v1020 = vunpack.c.l.b16 %v952
    %v1021 = vunpack.c.l.b16 %v960
    %v1022 = vunpack.c.l.b16 %v967
    %v1023 = vunpack.c.l.b16 %v975
    %v1024 = vunpack.c.l.b16 %v982
    %v1025 = vunpack.c.l.b16 %v990
    %v1026 = vunpack.c.l.b16 %v997
    %v1027 = vunpack.c.l.b16 %v1005
    %v1028 = vunpack.c.l.b16 %v1012
    %v1029 = vpack.c.b16 %v1014, %v1013
    %v1030 = vpack.c.b16 %v1016, %v1015
    %v1031 = vpack.c.b16 %v1018, %v1017
    %v1032 = vpack.c.b16 %v1020, %v1019
    %v1033 = vpack.c.b16 %v1022, %v1021
    %v1034 = vpack.c.b16 %v1024, %v1023
    %v1035 = vpack.c.b16 %v1026, %v1025
    %v1036 = vpack.c.b16 %v1028, %v1027
    %v1041 = vunpack.c.l.b16 %v116
    %v1042 = vunpack.c.l.b16 %v117
    %v1043 = vunpack.c.l.b16 %v118
    %v1044 = vunpack.c.l.b16 %v119
    %v1045 = vpack.c.b16 %v1042, %v1041
    %v1046 = vpack.c.b16 %v1044, %v1043
    %v1050 = vsel %vm355, %v1029, 0
    %v1053 = vsel %vm355, %v1030, 0
    %v1056 = vsel %vm355, %v1031, 0
    %v1059 = vsel %vm355, %v1032, 0
    %v1062 = vsel %vm355, %v1033, 0
    %v1065 = vsel %vm355, %v1034, 0
    %v1068 = vsel %vm355, %v1035, 0
    %v1071 = vsel %vm355, %v1036, 0
    %1073 = vmatprep.subr.bf16.mxu0 0
    %1074 = vmatpush1.bf16.msra.mxu0 %v1045
    %1075 = vmatprep.subr.bf16.mxu0 0
    %1076 = vmatpush1.bf16.msra.mxu0 %v1046
    %1077 = vmatprep.subr.bf16.mxu0 0
    %1078 = vmatpush1.bf16.msra.mxu0 0
    %1079 = vmatprep.subr.bf16.mxu0 0
    %1080 = vmatpush1.bf16.msra.mxu0 0
    %1081 = vmatprep.subr.bf16.mxu0 0
    %1082 = vmatpush1.bf16.msra.mxu0 0
    %1083 = vmatprep.subr.bf16.mxu0 0
    %1084 = vmatpush1.bf16.msra.mxu0 0
    %1085 = vmatprep.subr.bf16.mxu0 0
    %1086 = vmatpush1.bf16.msra.mxu0 0
    %1087 = vmatprep.subr.bf16.mxu0 0
    %1088 = vmatpush1.bf16.msra.mxu0 0
    %1089 = vmatprep.subr.bf16.mxu0 0
    %1090 = vmatpush1.bf16.msra.mxu0 0
    %1091 = vmatprep.subr.bf16.mxu0 0
    %1092 = vmatpush1.bf16.msra.mxu0 0
    %1093 = vmatprep.subr.bf16.mxu0 0
    %1094 = vmatpush1.bf16.msra.mxu0 0
    %1095 = vmatprep.subr.bf16.mxu0 0
    %1096 = vmatpush1.bf16.msra.mxu0 0
    %1097 = vmatprep.subr.bf16.mxu0 0
    %1098 = vmatpush1.bf16.msra.mxu0 0
    %1099 = vmatprep.subr.bf16.mxu0 0
    %1100 = vmatpush1.bf16.msra.mxu0 0
    %1101 = vmatprep.subr.bf16.mxu0 0
    %1102 = vmatpush1.bf16.msra.mxu0 0
    %1103 = vmatprep.subr.bf16.mxu0 0
    %1104 = vmatpush1.bf16.msra.mxu0 0
    %1105 = vmatprep.mubr.bf16.mxu0 0
    %1106 = vmatmul.mubr.bf16.gmra.mrb[0].mxu0 %v1050
    %v1107 = vpop.f32.mrb[0].mxu0
    %v1108 = vadd.f32 0.0, %v1107
    %v1109 = vpop.f32.mrb[0].mxu0
    %v1110 = vpop.f32.mrb[0].mxu0
    %v1111 = vadd.f32 0.0, %v1110
    %v1112 = vpop.f32.mrb[0].mxu0
    %1113 = vmatprep.mubr.bf16.mxu0 0
    %1114 = vmatmul.mubr.bf16.gmra.mrb[0].mxu0 %v1053
    %v1115 = vpop.f32.mrb[0].mxu0
    %v1116 = vadd.f32 0.0, %v1115
    %v1117 = vpop.f32.mrb[0].mxu0
    %v1118 = vpop.f32.mrb[0].mxu0
    %v1119 = vadd.f32 0.0, %v1118
    %v1120 = vpop.f32.mrb[0].mxu0
    %1121 = vmatprep.mubr.bf16.mxu0 0
    %1122 = vmatmul.mubr.bf16.gmra.mrb[0].mxu0 %v1056
    %v1123 = vpop.f32.mrb[0].mxu0
    %v1124 = vadd.f32 0.0, %v1123
    %v1125 = vpop.f32.mrb[0].mxu0
    %v1126 = vpop.f32.mrb[0].mxu0
    %v1127 = vadd.f32 0.0, %v1126
    %v1128 = vpop.f32.mrb[0].mxu0
    %1129 = vmatprep.mubr.bf16.mxu0 0
    %1130 = vmatmul.mubr.bf16.gmra.mrb[0].mxu0 %v1059
    %v1131 = vpop.f32.mrb[0].mxu0
    %v1132 = vadd.f32 0.0, %v1131
    %v1133 = vpop.f32.mrb[0].mxu0
    %v1134 = vpop.f32.mrb[0].mxu0
    %v1135 = vadd.f32 0.0, %v1134
    %v1136 = vpop.f32.mrb[0].mxu0
    %1137 = vmatprep.mubr.bf16.mxu0 0
    %1138 = vmatmul.mubr.bf16.gmra.mrb[0].mxu0 %v1062
    %v1139 = vpop.f32.mrb[0].mxu0
    %v1140 = vadd.f32 0.0, %v1139
    %v1141 = vpop.f32.mrb[0].mxu0
    %v1142 = vpop.f32.mrb[0].mxu0
    %v1143 = vadd.f32 0.0, %v1142
    %v1144 = vpop.f32.mrb[0].mxu0
    %1145 = vmatprep.mubr.bf16.mxu0 0
    %1146 = vmatmul.mubr.bf16.gmra.mrb[0].mxu0 %v1065
    %v1147 = vpop.f32.mrb[0].mxu0
    %v1148 = vadd.f32 0.0, %v1147
    %v1149 = vpop.f32.mrb[0].mxu0
    %v1150 = vpop.f32.mrb[0].mxu0
    %v1151 = vadd.f32 0.0, %v1150
    %v1152 = vpop.f32.mrb[0].mxu0
    %1153 = vmatprep.mubr.bf16.mxu0 0
    %1154 = vmatmul.mubr.bf16.gmra.mrb[0].mxu0 %v1068
    %v1155 = vpop.f32.mrb[0].mxu0
    %v1156 = vadd.f32 0.0, %v1155
    %v1157 = vpop.f32.mrb[0].mxu0
    %v1158 = vpop.f32.mrb[0].mxu0
    %v1159 = vadd.f32 0.0, %v1158
    %v1160 = vpop.f32.mrb[0].mxu0
    %1161 = vmatprep.mubr.bf16.mxu0 0
    %1162 = vmatmul.mubr.bf16.gmra.mrb[0].mxu0 %v1071
    %v1163 = vpop.f32.mrb[0].mxu0
    %v1164 = vadd.f32 0.0, %v1163
    %v1165 = vpop.f32.mrb[0].mxu0
    %v1166 = vpop.f32.mrb[0].mxu0
    %v1167 = vadd.f32 0.0, %v1166
    %v1168 = vpop.f32.mrb[0].mxu0
    %1169 = vdwg.mxu0
    %v1170 = vadd.f32 %v874, %v1108
    %v1171 = vadd.f32 %v875, %v1111
    %v1172 = vadd.f32 %v876, %v1116
    %v1173 = vadd.f32 %v877, %v1119
    %v1174 = vadd.f32 %v878, %v1124
    %v1175 = vadd.f32 %v879, %v1127
    %v1176 = vadd.f32 %v880, %v1132
    %v1177 = vadd.f32 %v881, %v1135
    %v1178 = vadd.f32 %v882, %v1140
    %v1179 = vadd.f32 %v883, %v1143
    %v1180 = vadd.f32 %v884, %v1148
    %v1181 = vadd.f32 %v885, %v1151
    %v1182 = vadd.f32 %v886, %v1156
    %v1183 = vadd.f32 %v887, %v1159
    %v1184 = vadd.f32 %v888, %v1164
    %v1185 = vadd.f32 %v889, %v1167
    %vm1186 = vcmask 1041408
    %vm1187 = vcmask 1045508
    %vm1188 = vmor %vm1186, %vm1187
    %v1189 = vrot.slane %v80, 6
    %v1190 = vrot.slane %v1189, 4
    %v1191 = vrot.slane %v81, 6
    %v1192 = vsel %vm1188, %v1190, %v1191
    %v1193 = vrot.slane %v1191, 4
    %v1194 = vrot.slane %v82, 6
    %v1195 = vsel %vm1188, %v1193, %v1194
    %v1196 = vrot.slane %v83, 6
    %v1197 = vrot.slane %v1196, 4
    %v1198 = vrot.slane %v84, 6
    %v1199 = vsel %vm1188, %v1197, %v1198
    %v1200 = vrot.slane %v1198, 4
    %v1201 = vrot.slane %v85, 6
    %v1202 = vsel %vm1188, %v1200, %v1201
    %v1203 = vrot.slane %v86, 6
    %v1204 = vrot.slane %v1203, 4
    %v1205 = vrot.slane %v87, 6
    %v1206 = vsel %vm1188, %v1204, %v1205
    %v1207 = vrot.slane %v1205, 4
    %v1208 = vrot.slane %v88, 6
    %v1209 = vsel %vm1188, %v1207, %v1208
    %v1210 = vrot.slane %v89, 6
    %v1211 = vrot.slane %v1210, 4
    %v1212 = vrot.slane %v90, 6
    %v1213 = vsel %vm1188, %v1211, %v1212
    %v1214 = vrot.slane %v1212, 4
    %v1215 = vrot.slane %v91, 6
    %v1216 = vsel %vm1188, %v1214, %v1215
    %v1217 = vrot.slane %v92, 6
    %v1218 = vrot.slane %v1217, 4
    %v1219 = vrot.slane %v93, 6
    %v1220 = vsel %vm1188, %v1218, %v1219
    %v1221 = vrot.slane %v1219, 4
    %v1222 = vrot.slane %v94, 6
    %v1223 = vsel %vm1188, %v1221, %v1222
    %v1224 = vrot.slane %v95, 6
    %v1225 = vrot.slane %v1224, 4
    %v1226 = vrot.slane %v96, 6
    %v1227 = vsel %vm1188, %v1225, %v1226
    %v1228 = vrot.slane %v1226, 4
    %v1229 = vrot.slane %v97, 6
    %v1230 = vsel %vm1188, %v1228, %v1229
    %v1231 = vrot.slane %v98, 6
    %v1232 = vrot.slane %v1231, 4
    %v1233 = vrot.slane %v99, 6
    %v1234 = vsel %vm1188, %v1232, %v1233
    %v1235 = vrot.slane %v1233, 4
    %v1236 = vrot.slane %v100, 6
    %v1237 = vsel %vm1188, %v1235, %v1236
    %v1238 = vrot.slane %v101, 6
    %v1239 = vrot.slane %v1238, 4
    %v1240 = vrot.slane %v102, 6
    %v1241 = vsel %vm1188, %v1239, %v1240
    %v1242 = vrot.slane %v1240, 4
    %v1243 = vrot.slane %v103, 6
    %v1244 = vsel %vm1188, %v1242, %v1243
    %v1245 = vunpack.c.l.b16 %v1192
    %v1246 = vunpack.c.l.b16 %v1195
    %v1247 = vunpack.c.l.b16 %v1199
    %v1248 = vunpack.c.l.b16 %v1202
    %v1249 = vunpack.c.l.b16 %v1206
    %v1250 = vunpack.c.l.b16 %v1209
    %v1251 = vunpack.c.l.b16 %v1213
    %v1252 = vunpack.c.l.b16 %v1216
    %v1253 = vunpack.c.l.b16 %v1220
    %v1254 = vunpack.c.l.b16 %v1223
    %v1255 = vunpack.c.l.b16 %v1227
    %v1256 = vunpack.c.l.b16 %v1230
    %v1257 = vunpack.c.l.b16 %v1234
    %v1258 = vunpack.c.l.b16 %v1237
    %v1259 = vunpack.c.l.b16 %v1241
    %v1260 = vunpack.c.l.b16 %v1244
    %v1261 = vpack.c.b16 %v1246, %v1245
    %v1262 = vpack.c.b16 %v1248, %v1247
    %v1263 = vpack.c.b16 %v1250, %v1249
    %v1264 = vpack.c.b16 %v1252, %v1251
    %v1265 = vpack.c.b16 %v1254, %v1253
    %v1266 = vpack.c.b16 %v1256, %v1255
    %v1267 = vpack.c.b16 %v1258, %v1257
    %v1268 = vpack.c.b16 %v1260, %v1259
    %v1273 = vunpack.c.l.b16 %v120
    %v1274 = vunpack.c.l.b16 %v121
    %v1275 = vunpack.c.l.b16 %v122
    %v1276 = vunpack.c.l.b16 %v123
    %v1277 = vpack.c.b16 %v1274, %v1273
    %v1278 = vpack.c.b16 %v1276, %v1275
    %v1282 = vsel %vm355, %v1261, 0
    %v1285 = vsel %vm355, %v1262, 0
    %v1288 = vsel %vm355, %v1263, 0
    %v1291 = vsel %vm355, %v1264, 0
    %v1294 = vsel %vm355, %v1265, 0
    %v1297 = vsel %vm355, %v1266, 0
    %v1300 = vsel %vm355, %v1267, 0
    %v1303 = vsel %vm355, %v1268, 0
    %1305 = vmatprep.subr.bf16.mxu0 0
    %1306 = vmatpush1.bf16.msra.mxu0 %v1277
    %1307 = vmatprep.subr.bf16.mxu0 0
    %1308 = vmatpush1.bf16.msra.mxu0 %v1278
    %1309 = vmatprep.subr.bf16.mxu0 0
    %1310 = vmatpush1.bf16.msra.mxu0 0
    %1311 = vmatprep.subr.bf16.mxu0 0
    %1312 = vmatpush1.bf16.msra.mxu0 0
    %1313 = vmatprep.subr.bf16.mxu0 0
    %1314 = vmatpush1.bf16.msra.mxu0 0
    %1315 = vmatprep.subr.bf16.mxu0 0
    %1316 = vmatpush1.bf16.msra.mxu0 0
    %1317 = vmatprep.subr.bf16.mxu0 0
    %1318 = vmatpush1.bf16.msra.mxu0 0
    %1319 = vmatprep.subr.bf16.mxu0 0
    %1320 = vmatpush1.bf16.msra.mxu0 0
    %1321 = vmatprep.subr.bf16.mxu0 0
    %1322 = vmatpush1.bf16.msra.mxu0 0
    %1323 = vmatprep.subr.bf16.mxu0 0
    %1324 = vmatpush1.bf16.msra.mxu0 0
    %1325 = vmatprep.subr.bf16.mxu0 0
    %1326 = vmatpush1.bf16.msra.mxu0 0
    %1327 = vmatprep.subr.bf16.mxu0 0
    %1328 = vmatpush1.bf16.msra.mxu0 0
    %1329 = vmatprep.subr.bf16.mxu0 0
    %1330 = vmatpush1.bf16.msra.mxu0 0
    %1331 = vmatprep.subr.bf16.mxu0 0
    %1332 = vmatpush1.bf16.msra.mxu0 0
    %1333 = vmatprep.subr.bf16.mxu0 0
    %1334 = vmatpush1.bf16.msra.mxu0 0
    %1335 = vmatprep.subr.bf16.mxu0 0
    %1336 = vmatpush1.bf16.msra.mxu0 0
    %1337 = vmatprep.mubr.bf16.mxu0 0
    %1338 = vmatmul.mubr.bf16.gmra.mrb[0].mxu0 %v1282
    %v1339 = vpop.f32.mrb[0].mxu0
    %v1340 = vadd.f32 0.0, %v1339
    %v1341 = vpop.f32.mrb[0].mxu0
    %v1342 = vpop.f32.mrb[0].mxu0
    %v1343 = vadd.f32 0.0, %v1342
    %v1344 = vpop.f32.mrb[0].mxu0
    %1345 = vmatprep.mubr.bf16.mxu0 0
    %1346 = vmatmul.mubr.bf16.gmra.mrb[0].mxu0 %v1285
    %v1347 = vpop.f32.mrb[0].mxu0
    %v1348 = vadd.f32 0.0, %v1347
    %v1349 = vpop.f32.mrb[0].mxu0
    %v1350 = vpop.f32.mrb[0].mxu0
    %v1351 = vadd.f32 0.0, %v1350
    %v1352 = vpop.f32.mrb[0].mxu0
    %1353 = vmatprep.mubr.bf16.mxu0 0
    %1354 = vmatmul.mubr.bf16.gmra.mrb[0].mxu0 %v1288
    %v1355 = vpop.f32.mrb[0].mxu0
    %v1356 = vadd.f32 0.0, %v1355
    %v1357 = vpop.f32.mrb[0].mxu0
    %v1358 = vpop.f32.mrb[0].mxu0
    %v1359 = vadd.f32 0.0, %v1358
    %v1360 = vpop.f32.mrb[0].mxu0
    %1361 = vmatprep.mubr.bf16.mxu0 0
    %1362 = vmatmul.mubr.bf16.gmra.mrb[0].mxu0 %v1291
    %v1363 = vpop.f32.mrb[0].mxu0
    %v1364 = vadd.f32 0.0, %v1363
    %v1365 = vpop.f32.mrb[0].mxu0
    %v1366 = vpop.f32.mrb[0].mxu0
    %v1367 = vadd.f32 0.0, %v1366
    %v1368 = vpop.f32.mrb[0].mxu0
    %1369 = vmatprep.mubr.bf16.mxu0 0
    %1370 = vmatmul.mubr.bf16.gmra.mrb[0].mxu0 %v1294
    %v1371 = vpop.f32.mrb[0].mxu0
    %v1372 = vadd.f32 0.0, %v1371
    %v1373 = vpop.f32.mrb[0].mxu0
    %v1374 = vpop.f32.mrb[0].mxu0
    %v1375 = vadd.f32 0.0, %v1374
    %v1376 = vpop.f32.mrb[0].mxu0
    %1377 = vmatprep.mubr.bf16.mxu0 0
    %1378 = vmatmul.mubr.bf16.gmra.mrb[0].mxu0 %v1297
    %v1379 = vpop.f32.mrb[0].mxu0
    %v1380 = vadd.f32 0.0, %v1379
    %v1381 = vpop.f32.mrb[0].mxu0
    %v1382 = vpop.f32.mrb[0].mxu0
    %v1383 = vadd.f32 0.0, %v1382
    %v1384 = vpop.f32.mrb[0].mxu0
    %1385 = vmatprep.mubr.bf16.mxu0 0
    %1386 = vmatmul.mubr.bf16.gmra.mrb[0].mxu0 %v1300
    %v1387 = vpop.f32.mrb[0].mxu0
    %v1388 = vadd.f32 0.0, %v1387
    %v1389 = vpop.f32.mrb[0].mxu0
    %v1390 = vpop.f32.mrb[0].mxu0
    %v1391 = vadd.f32 0.0, %v1390
    %v1392 = vpop.f32.mrb[0].mxu0
    %1393 = vmatprep.mubr.bf16.mxu0 0
    %1394 = vmatmul.mubr.bf16.gmra.mrb[0].mxu0 %v1303
    %v1395 = vpop.f32.mrb[0].mxu0
    %v1396 = vadd.f32 0.0, %v1395
    %v1397 = vpop.f32.mrb[0].mxu0
    %v1398 = vpop.f32.mrb[0].mxu0
    %v1399 = vadd.f32 0.0, %v1398
    %v1400 = vpop.f32.mrb[0].mxu0
    %1401 = vdwg.mxu0
    %v1402 = vadd.f32 %v1170, %v1340
    %v1403 = vadd.f32 %v1171, %v1343
    %v1404 = vadd.f32 %v1172, %v1348
    %v1405 = vadd.f32 %v1173, %v1351
    %v1406 = vadd.f32 %v1174, %v1356
    %v1407 = vadd.f32 %v1175, %v1359
    %v1408 = vadd.f32 %v1176, %v1364
    %v1409 = vadd.f32 %v1177, %v1367
    %v1410 = vadd.f32 %v1178, %v1372
    %v1411 = vadd.f32 %v1179, %v1375
    %v1412 = vadd.f32 %v1180, %v1380
    %v1413 = vadd.f32 %v1181, %v1383
    %v1414 = vadd.f32 %v1182, %v1388
    %v1415 = vadd.f32 %v1183, %v1391
    %v1416 = vadd.f32 %v1184, %v1396
    %v1417 = vadd.f32 %v1185, %v1399
    %v1418 = vld [vmem:[%s2] sm:$0x1]
    %v1420 = vlaneseq
    %v1421 = vshrl.u32 %v1420, 7
    %v1422 = vsub.s32 0, %v1421
    %v1423 = vrot.slane %v1418, %v1422
    %v1425 = vadd.f32 %v1402, %v1423
    %v1426 = vadd.f32 %v1403, %v1423
    %v1427 = vadd.f32 %v1404, %v1423
    %v1428 = vadd.f32 %v1405, %v1423
    %v1429 = vadd.f32 %v1406, %v1423
    %v1430 = vadd.f32 %v1407, %v1423
    %v1431 = vadd.f32 %v1408, %v1423
    %v1432 = vadd.f32 %v1409, %v1423
    %v1433 = vadd.f32 %v1410, %v1423
    %v1434 = vadd.f32 %v1411, %v1423
    %v1435 = vadd.f32 %v1412, %v1423
    %v1436 = vadd.f32 %v1413, %v1423
    %v1437 = vadd.f32 %v1414, %v1423
    %v1438 = vadd.f32 %v1415, %v1423
    %v1439 = vadd.f32 %v1416, %v1423
    %v1440 = vadd.f32 %v1417, %v1423
    %v1441 = vmax.f32 %v1425, 0.0
    %v1442 = vmax.f32 %v1426, 0.0
    %v1443 = vmax.f32 %v1427, 0.0
    %v1444 = vmax.f32 %v1428, 0.0
    %v1445 = vmax.f32 %v1429, 0.0
    %v1446 = vmax.f32 %v1430, 0.0
    %v1447 = vmax.f32 %v1431, 0.0
    %v1448 = vmax.f32 %v1432, 0.0
    %v1449 = vmax.f32 %v1433, 0.0
    %v1450 = vmax.f32 %v1434, 0.0
    %v1451 = vmax.f32 %v1435, 0.0
    %v1452 = vmax.f32 %v1436, 0.0
    %v1453 = vmax.f32 %v1437, 0.0
    %v1454 = vmax.f32 %v1438, 0.0
    %v1455 = vmax.f32 %v1439, 0.0
    %v1456 = vmax.f32 %v1440, 0.0
    %v1457 = vld [vmem:[#allocation7] sm:$0xff]
    %v1458 = vld [vmem:[#allocation7 + $0x8] sm:$0xff]
    %v1459 = vmul.f32 %v1441, %v1457
    %v1460 = vmul.f32 %v1442, %v1458
    %v1461 = vmul.f32 %v1443, %v1457
    %v1462 = vmul.f32 %v1444, %v1458
    %v1463 = vmul.f32 %v1445, %v1457
    %v1464 = vmul.f32 %v1446, %v1458
    %v1465 = vmul.f32 %v1447, %v1457
    %v1466 = vmul.f32 %v1448, %v1458
    %v1467 = vmul.f32 %v1449, %v1457
    %v1468 = vmul.f32 %v1450, %v1458
    %v1469 = vmul.f32 %v1451, %v1457
    %v1470 = vmul.f32 %v1452, %v1458
    %v1471 = vmul.f32 %v1453, %v1457
    %v1472 = vmul.f32 %v1454, %v1458
    %v1473 = vmul.f32 %v1455, %v1457
    %v1474 = vmul.f32 %v1456, %v1458
    %v1475 = vmax.f32 %v1459, %v1460
    %v1476 = vrot.slane %v1475, 4
    %v1477 = vmax.f32 %v1475, %v1476
    %v1478 = vrot.slane %v1477, 2
    %v1479 = vmax.f32 %v1477, %v1478
    %v1480 = vrot.slane %v1479, 1
    %v1481 = vmax.f32 %v1479, %v1480
    %v1482 = vmax.f32 %v1461, %v1462
    %v1483 = vrot.slane %v1482, 4
    %v1484 = vmax.f32 %v1482, %v1483
    %v1485 = vrot.slane %v1484, 2
    %v1486 = vmax.f32 %v1484, %v1485
    %v1487 = vrot.slane %v1486, 1
    %v1488 = vmax.f32 %v1486, %v1487
    %v1489 = vmax.f32 %v1463, %v1464
    %v1490 = vrot.slane %v1489, 4
    %v1491 = vmax.f32 %v1489, %v1490
    %v1492 = vrot.slane %v1491, 2
    %v1493 = vmax.f32 %v1491, %v1492
    %v1494 = vrot.slane %v1493, 1
    %v1495 = vmax.f32 %v1493, %v1494
    %v1496 = vmax.f32 %v1465, %v1466
    %v1497 = vrot.slane %v1496, 4
    %v1498 = vmax.f32 %v1496, %v1497
    %v1499 = vrot.slane %v1498, 2
    %v1500 = vmax.f32 %v1498, %v1499
    %v1501 = vrot.slane %v1500, 1
    %v1502 = vmax.f32 %v1500, %v1501
    %v1503 = vmax.f32 %v1467, %v1468
    %v1504 = vrot.slane %v1503, 4
    %v1505 = vmax.f32 %v1503, %v1504
    %v1506 = vrot.slane %v1505, 2
    %v1507 = vmax.f32 %v1505, %v1506
    %v1508 = vrot.slane %v1507, 1
    %v1509 = vmax.f32 %v1507, %v1508
    %v1510 = vmax.f32 %v1469, %v1470
    %v1511 = vrot.slane %v1510, 4
    %v1512 = vmax.f32 %v1510, %v1511
    %v1513 = vrot.slane %v1512, 2
    %v1514 = vmax.f32 %v1512, %v1513
    %v1515 = vrot.slane %v1514, 1
    %v1516 = vmax.f32 %v1514, %v1515
    %v1517 = vmax.f32 %v1471, %v1472
    %v1518 = vrot.slane %v1517, 4
    %v1519 = vmax.f32 %v1517, %v1518
    %v1520 = vrot.slane %v1519, 2
    %v1521 = vmax.f32 %v1519, %v1520
    %v1522 = vrot.slane %v1521, 1
    %v1523 = vmax.f32 %v1521, %v1522
    %v1524 = vmax.f32 %v1473, %v1474
    %v1525 = vrot.slane %v1524, 4
    %v1526 = vmax.f32 %v1524, %v1525
    %v1527 = vrot.slane %v1526, 2
    %v1528 = vmax.f32 %v1526, %v1527
    %v1529 = vrot.slane %v1528, 1
    %v1530 = vmax.f32 %v1528, %v1529
    %v1531 = vpack.c.bf16 %v1481, %v1481
    %v1532 = vpack.c.bf16 %v1488, %v1488
    %v1533 = vpack.c.bf16 %v1495, %v1495
    %v1534 = vpack.c.bf16 %v1502, %v1502
    %v1535 = vpack.c.bf16 %v1509, %v1509
    %v1536 = vpack.c.bf16 %v1516, %v1516
    %v1537 = vpack.c.bf16 %v1523, %v1523
    %v1538 = vpack.c.bf16 %v1530, %v1530
    %v1539 = vld [vmem:[#allocation8] sm:$0xf]
    %v1540 = vld [vmem:[#allocation8 + $0x4] sm:$0xf]
    %v1541 = vld [vmem:[#allocation8 + $0x8] sm:$0xf]
    %v1542 = vld [vmem:[#allocation8 + $0xc] sm:$0xf]
    %v1543 = vld [vmem:[#allocation8 + $0x10] sm:$0xf]
    %v1544 = vld [vmem:[#allocation8 + $0x14] sm:$0xf]
    %v1545 = vld [vmem:[#allocation8 + $0x18] sm:$0xf]
    %v1546 = vld [vmem:[#allocation8 + $0x1c] sm:$0xf]
    %v1547 = vld [vmem:[#allocation8 + $0x20] sm:$0xf]
    %v1548 = vld [vmem:[#allocation8 + $0x24] sm:$0xf]
    %v1549 = vld [vmem:[#allocation8 + $0x28] sm:$0xf]
    %v1550 = vld [vmem:[#allocation8 + $0x2c] sm:$0xf]
    %v1551 = vld [vmem:[#allocation8 + $0x30] sm:$0xf]
    %v1552 = vld [vmem:[#allocation8 + $0x34] sm:$0xf]
    %v1553 = vld [vmem:[#allocation8 + $0x38] sm:$0xf]
    %v1554 = vld [vmem:[#allocation8 + $0x3c] sm:$0xf]
    %v1555 = vld [vmem:[%s5] sm:$0x1]
    %v1557 = vlaneseq
    %v1558 = vshrl.u32 %v1557, 7
    %v1559 = vsub.s32 0, %v1558
    %v1560 = vrot.slane %v1555, %v1559
    %v1570 = vunpack.c.l.b16 %v1531
    %v1571 = vunpack.c.l.b16 %v1532
    %v1572 = vunpack.c.l.b16 %v1533
    %v1573 = vunpack.c.l.b16 %v1534
    %v1574 = vunpack.c.l.b16 %v1535
    %v1575 = vunpack.c.l.b16 %v1536
    %v1576 = vunpack.c.l.b16 %v1537
    %v1577 = vunpack.c.l.b16 %v1538
    %vm1578 = vcmask 1041409
    %v1579 = vsel %vm1578, %v1571, %v1570
    %vm1580 = vcmask 1042434
    %v1581 = vsel %vm1580, %v1572, %v1579
    %vm1582 = vcmask 1043459
    %v1583 = vsel %vm1582, %v1573, %v1581
    %vm1584 = vcmask 1044484
    %v1585 = vsel %vm1584, %v1574, %v1583
    %vm1586 = vcmask 1045509
    %v1587 = vsel %vm1586, %v1575, %v1585
    %vm1588 = vcmask 1046534
    %v1589 = vsel %vm1588, %v1576, %v1587
    %vm1590 = vcmask 1047559
    %v1591 = vsel %vm1590, %v1577, %v1589
    %v1592 = vpack.c.b16 %v1591, %v1591
    %v1610 = vunpack.c.l.b16 %v1539
    %v1611 = vunpack.c.l.b16 %v1540
    %v1612 = vunpack.c.l.b16 %v1541
    %v1613 = vunpack.c.l.b16 %v1542
    %v1614 = vunpack.c.l.b16 %v1543
    %v1615 = vunpack.c.l.b16 %v1544
    %v1616 = vunpack.c.l.b16 %v1545
    %v1617 = vunpack.c.l.b16 %v1546
    %v1618 = vunpack.c.l.b16 %v1547
    %v1619 = vunpack.c.l.b16 %v1548
    %v1620 = vunpack.c.l.b16 %v1549
    %v1621 = vunpack.c.l.b16 %v1550
    %v1622 = vunpack.c.l.b16 %v1551
    %v1623 = vunpack.c.l.b16 %v1552
    %v1624 = vunpack.c.l.b16 %v1553
    %v1625 = vunpack.c.l.b16 %v1554
    %v1626 = vpack.c.b16 %v1611, %v1610
    %v1627 = vpack.c.b16 %v1613, %v1612
    %v1628 = vpack.c.b16 %v1615, %v1614
    %v1629 = vpack.c.b16 %v1617, %v1616
    %v1630 = vpack.c.b16 %v1619, %v1618
    %v1631 = vpack.c.b16 %v1621, %v1620
    %v1632 = vpack.c.b16 %v1623, %v1622
    %v1633 = vpack.c.b16 %v1625, %v1624
    %1642 = vmatprep.subr.bf16.mxu0 0
    %1643 = vmatpush1.bf16.msra.mxu0 %v1626
    %1644 = vmatprep.subr.bf16.mxu0 0
    %1645 = vmatpush1.bf16.msra.mxu0 %v1627
    %1646 = vmatprep.subr.bf16.mxu0 0
    %1647 = vmatpush1.bf16.msra.mxu0 %v1628
    %1648 = vmatprep.subr.bf16.mxu0 0
    %1649 = vmatpush1.bf16.msra.mxu0 %v1629
    %1650 = vmatprep.subr.bf16.mxu0 0
    %1651 = vmatpush1.bf16.msra.mxu0 %v1630
    %1652 = vmatprep.subr.bf16.mxu0 0
    %1653 = vmatpush1.bf16.msra.mxu0 %v1631
    %1654 = vmatprep.subr.bf16.mxu0 0
    %1655 = vmatpush1.bf16.msra.mxu0 %v1632
    %1656 = vmatprep.subr.bf16.mxu0 0
    %1657 = vmatpush1.bf16.msra.mxu0 %v1633
    %1658 = vmatprep.subr.bf16.mxu0 0
    %1659 = vmatpush1.bf16.msra.mxu0 0
    %1660 = vmatprep.subr.bf16.mxu0 0
    %1661 = vmatpush1.bf16.msra.mxu0 0
    %1662 = vmatprep.subr.bf16.mxu0 0
    %1663 = vmatpush1.bf16.msra.mxu0 0
    %1664 = vmatprep.subr.bf16.mxu0 0
    %1665 = vmatpush1.bf16.msra.mxu0 0
    %1666 = vmatprep.subr.bf16.mxu0 0
    %1667 = vmatpush1.bf16.msra.mxu0 0
    %1668 = vmatprep.subr.bf16.mxu0 0
    %1669 = vmatpush1.bf16.msra.mxu0 0
    %1670 = vmatprep.subr.bf16.mxu0 0
    %1671 = vmatpush1.bf16.msra.mxu0 0
    %1672 = vmatprep.subr.bf16.mxu0 0
    %1673 = vmatpush1.bf16.msra.mxu0 0
    %1674 = vmatprep.mubr.bf16.mxu0 0
    %1675 = vmatmul.mubr.bf16.gmra.mrb[0].mxu0 %v1592
    %v1676 = vpop.f32.mrb[0].mxu0
    %v1677 = vadd.f32 %v1560, %v1676
    %v1678 = vpop.f32.mrb[0].mxu0
    %v1679 = vpop.f32.mrb[0].mxu0
    %v1680 = vpop.f32.mrb[0].mxu0
    %1681 = vdwg.mxu0
    %1682 = vst [vmem:[#allocation10] sm:$0xff] %v1677
    // Predicated region
    $region42: #{tpu_custom_call.1} parent=1 // pred_check
      _
    $region43: #{tpu_custom_call.1} parent=1 // pred_check_branch
      %1684 = sbr.rel (0) target = $region45
    $region44: #{tpu_custom_call.1} parent=1 // pred_region
      %s1686 = ssub.s32 128, 128
      %1687 = vsyncadd [#allocation4], %s1686
      %s1689 = sshll.u32 [#allocation10], 4
      %s1690 = int_to_ptr.vmem [resolvable:$true] %s1689
      %1692 = dma.vmem_to_hbm [thread:$0]  %s1690, 128, %s6, [#allocation4]
    $region45: #{tpu_custom_call.1} parent=1 // pred_fallthru
      _
    // Predicated region
    $region46: #{tpu_custom_call.1} parent=1 // pred_check
      _
    $region47: #{tpu_custom_call.1} parent=1 // pred_check_branch
      %1694 = sbr.rel (0) target = $region49
    $region48: #{tpu_custom_call.1} parent=1 // pred_region
      %1695 = dma.done [#allocation4], 128
    $region49: #{tpu_custom_call.1} parent=1 // pred_fallthru
      _
    %1696 = vsyncpa [#allocation3], 1
    %1697 = vsyncpa [#allocation6], 1
    %1698 = vsyncpa [#allocation9], 1
    %1699 = vsyncpa [#allocation4], 1

</llo_original>
